<compile_context>
chip_gen: v7x
topology: tpu7x:2x2x1
jax: 0.10.0
libtpu: 0.0.40
codegen_flags: <defaults>
</compile_context>

<pallas_src>
import jax
import jax.numpy as jnp
from jax import lax
from jax.experimental import pallas as pl
from jax.experimental.pallas import tpu as pltpu


def lstm_kernel(x_ref, wih_ref, whh_ref, b_ref, wlin_ref, blin_ref, out_ref):
    """Single-program kernel: fully-unrolled recurrence over T timesteps.

    x_ref    : (T, 1)      input sequence (input_size = 1)
    wih_ref  : (1, 4H)     input->gates weights (row, since I == 1)
    whh_ref  : (H, 4H)     hidden->gates weights (transposed)
    b_ref    : (1, 4H)     b_ih + b_hh
    wlin_ref : (1, H)      final linear weights (row)
    blin_ref : (1, 1)      final linear bias
    out_ref  : (T, 1)      tanh(linear(h_t)) per timestep
    """
    T = x_ref.shape[0]
    H = whh_ref.shape[0]

    # Input projection for all timesteps on the VPU: (T,1) * (1,4H) + (1,4H).
    # (K=1 matmul avoided entirely; frees the MXU for the recurrent work.)
    xw = x_ref[...] * wih_ref[...] + b_ref[...]          # (T, 4H)

    # Zero initial hidden / cell state (matches self.hidden_cell zeros),
    # carried purely in vregs across the unrolled steps.
    h = jnp.zeros((1, H), jnp.float32)
    c = jnp.zeros((1, H), jnp.float32)

    hs_rows = []
    for t in range(T):                                   # static unroll (T small)
        gx = xw[t:t + 1, :]                              # (1, 4H), static slice
        gh = jnp.dot(h, whh_ref[...],                    # (1, 4H) recurrent matmul
                     preferred_element_type=jnp.float32)
        gates = gx + gh
        i = jax.nn.sigmoid(gates[:, 0 * H:1 * H])
        f = jax.nn.sigmoid(gates[:, 1 * H:2 * H])
        g = jnp.tanh(gates[:, 2 * H:3 * H])
        o = jax.nn.sigmoid(gates[:, 3 * H:4 * H])
        c = f * c + i * g
        h = o * jnp.tanh(c)
        hs_rows.append(h)

    hs = jnp.concatenate(hs_rows, axis=0)                # (T, H) — one tile

    # Final Linear(H -> 1) + tanh as VPU multiply + lane reduction
    # (avoids an N=1 MXU matmul).
    out_ref[...] = jnp.tanh(
        jnp.sum(hs * wlin_ref[...], axis=1, keepdims=True) + blin_ref[...]
    )


@jax.jit
def lstm_forward_pallas(x, params):
    """x: (T,) float32 sequence of scalars (input_size=1). Returns (T, 1)."""
    wih, whh, bih, bhh, wlin, blin = params
    assert wih.shape[1] == 1, "kernel specializes input_size == 1 (module default)"
    H = whh.shape[1]
    T = x.shape[0]

    x2d = x.reshape(T, 1).astype(jnp.float32)             # (T, 1)
    wih_row = wih.T.astype(jnp.float32)                   # (1, 4H)
    whh_t = whh.T.astype(jnp.float32)                     # (H, 4H)
    b = (bih + bhh).reshape(1, 4 * H).astype(jnp.float32)
    wlin_row = wlin.reshape(1, H).astype(jnp.float32)     # (1, H)
    blin2d = blin.reshape(1, 1).astype(jnp.float32)

    vmem = pl.BlockSpec(memory_space=pltpu.MemorySpace.VMEM)
    return pl.pallas_call(
        lstm_kernel,
        out_shape=jax.ShapeDtypeStruct((T, 1), jnp.float32),
        in_specs=[vmem] * 6,
        out_specs=vmem,
    )(x2d, wih_row, whh_t, b, wlin_row, blin2d)
    # TODO(synk): if many independent sequences are run, batch them so the
    # recurrent matmul becomes (B,H)@(H,4H) and fills the MXU M dimension.


def lstm_forward_ref(x, params):
    """Pure-JAX reference mirroring torch.nn.LSTM + Linear + tanh."""
    wih, whh, bih, bhh, wlin, blin = params
    H = whh.shape[1]

    def step(carry, xt):
        h, c = carry
        gates = wih @ xt + bih + whh @ h + bhh
        i = jax.nn.sigmoid(gates[0 * H:1 * H])
        f = jax.nn.sigmoid(gates[1 * H:2 * H])
        g = jnp.tanh(gates[2 * H:3 * H])
        o = jax.nn.sigmoid(gates[3 * H:4 * H])
        c = f * c + i * g
        h = o * jnp.tanh(c)
        return (h, c), h

    x2d = x.reshape(-1, 1).astype(jnp.float32)
    (_, _), hs = lax.scan(step, (jnp.zeros(H), jnp.zeros(H)), x2d)
    return jnp.tanh(hs @ wlin.T + blin)


def init_params(key, input_size=1, hidden=128, output_size=1):
    """Deterministic init mimicking PyTorch's U(-1/sqrt(H), 1/sqrt(H))."""
    ks = jax.random.split(key, 6)
    kH = 1.0 / jnp.sqrt(hidden)
    wih = jax.random.uniform(ks[0], (4 * hidden, input_size), jnp.float32, -kH, kH)
    whh = jax.random.uniform(ks[1], (4 * hidden, hidden), jnp.float32, -kH, kH)
    bih = jax.random.uniform(ks[2], (4 * hidden,), jnp.float32, -kH, kH)
    bhh = jax.random.uniform(ks[3], (4 * hidden,), jnp.float32, -kH, kH)
    kL = 1.0 / jnp.sqrt(hidden)
    wlin = jax.random.uniform(ks[4], (output_size, hidden), jnp.float32, -kL, kL)
    blin = jax.random.uniform(ks[5], (output_size,), jnp.float32, -kL, kL)
    return (wih, whh, bih, bhh, wlin, blin)


if __name__ == "__main__":
    key = jax.random.PRNGKey(0)
    kp, kx = jax.random.split(key)

    T = 8            # sequence length
    HIDDEN = 128     # hidden_layer_size (module default)
    params = init_params(kp, input_size=1, hidden=HIDDEN, output_size=1)
    x = jax.random.normal(kx, (T,), jnp.float32)   # input_seq of T scalar timesteps

    out = lstm_forward_pallas(x, params)
    out = jax.block_until_ready(out)

    ref = lstm_forward_ref(x, params)
    assert out.shape == (T, 1)
    assert jnp.allclose(out, ref, atol=1e-5, rtol=1e-5), (out, ref)

    print("KERNEL_OK")
</pallas_src>

<mosaic_0001>
module attributes {stable_mosaic.version = 11 : i64} {
  func.func @lstm_kernel(%arg0: memref<8x1xf32, #tpu.memory_space<vmem>>, %arg1: memref<1x512xf32, #tpu.memory_space<vmem>>, %arg2: memref<128x512xf32, #tpu.memory_space<vmem>>, %arg3: memref<1x512xf32, #tpu.memory_space<vmem>>, %arg4: memref<1x128xf32, #tpu.memory_space<vmem>>, %arg5: memref<1x1xf32, #tpu.memory_space<vmem>>, %arg6: memref<8x1xf32, #tpu.memory_space<vmem>>) attributes {dimension_semantics = [], scalar_prefetch = 0 : i64, scratch_operands = 0 : i64, tpu.core_type = #tpu.core_type<tc>} {
    %c0 = arith.constant 0 : index
    %c0_0 = arith.constant 0 : index
    %0 = vector.load %arg0[%c0, %c0_0] : memref<8x1xf32, #tpu.memory_space<vmem>>, vector<8x1xf32>
    %c0_1 = arith.constant 0 : index
    %c0_2 = arith.constant 0 : index
    %1 = vector.load %arg1[%c0_1, %c0_2] : memref<1x512xf32, #tpu.memory_space<vmem>>, vector<1x512xf32>
    %2 = vector.broadcast %0 : vector<8x1xf32> to vector<8x512xf32>
    %3 = vector.broadcast %1 : vector<1x512xf32> to vector<8x512xf32>
    %4 = arith.mulf %2, %3 : vector<8x512xf32>
    %c0_3 = arith.constant 0 : index
    %c0_4 = arith.constant 0 : index
    %5 = vector.load %arg3[%c0_3, %c0_4] : memref<1x512xf32, #tpu.memory_space<vmem>>, vector<1x512xf32>
    %6 = vector.broadcast %5 : vector<1x512xf32> to vector<8x512xf32>
    %7 = arith.addf %4, %6 : vector<8x512xf32>
    %cst = arith.constant 0.000000e+00 : f32
    %8 = vector.broadcast %cst : f32 to vector<1x128xf32>
    %cst_5 = arith.constant 0.000000e+00 : f32
    %9 = vector.broadcast %cst_5 : f32 to vector<1x128xf32>
    %10 = vector.extract_strided_slice %7 {offsets = [0, 0], sizes = [1, 512], strides = [1, 1]} : vector<8x512xf32> to vector<1x512xf32>
    %c0_6 = arith.constant 0 : index
    %c0_7 = arith.constant 0 : index
    %11 = vector.load %arg2[%c0_6, %c0_7] : memref<128x512xf32, #tpu.memory_space<vmem>>, vector<128x512xf32>
    %cst_8 = arith.constant dense<0.000000e+00> : vector<1x512xf32>
    %12 = tpu.matmul %8, %11, %cst_8 {dimension_numbers = #tpu.dot_dimension_numbers<[1], [0], [0], [1], [0, 0, 1, 1], [], []>} : vector<1x128xf32>, vector<128x512xf32>, vector<1x512xf32> -> vector<1x512xf32>
    %13 = arith.addf %10, %12 : vector<1x512xf32>
    %14 = vector.extract_strided_slice %13 {offsets = [0, 0], sizes = [1, 128], strides = [1, 1]} : vector<1x512xf32> to vector<1x128xf32>
    %15 = arith.negf %14 : vector<1x128xf32>
    %16 = math.exp %15 : vector<1x128xf32>
    %cst_9 = arith.constant 1.000000e+00 : f32
    %17 = vector.broadcast %cst_9 : f32 to vector<1x128xf32>
    %18 = arith.addf %17, %16 : vector<1x128xf32>
    %19 = arith.divf %17, %18 : vector<1x128xf32>
    %20 = vector.extract_strided_slice %13 {offsets = [0, 128], sizes = [1, 128], strides = [1, 1]} : vector<1x512xf32> to vector<1x128xf32>
    %21 = arith.negf %20 : vector<1x128xf32>
    %22 = math.exp %21 : vector<1x128xf32>
    %cst_10 = arith.constant 1.000000e+00 : f32
    %23 = vector.broadcast %cst_10 : f32 to vector<1x128xf32>
    %24 = arith.addf %23, %22 : vector<1x128xf32>
    %25 = arith.divf %23, %24 : vector<1x128xf32>
    %26 = vector.extract_strided_slice %13 {offsets = [0, 256], sizes = [1, 128], strides = [1, 1]} : vector<1x512xf32> to vector<1x128xf32>
    %27 = math.tanh %26 : vector<1x128xf32>
    %28 = vector.extract_strided_slice %13 {offsets = [0, 384], sizes = [1, 128], strides = [1, 1]} : vector<1x512xf32> to vector<1x128xf32>
    %29 = arith.negf %28 : vector<1x128xf32>
    %30 = math.exp %29 : vector<1x128xf32>
    %cst_11 = arith.constant 1.000000e+00 : f32
    %31 = vector.broadcast %cst_11 : f32 to vector<1x128xf32>
    %32 = arith.addf %31, %30 : vector<1x128xf32>
    %33 = arith.divf %31, %32 : vector<1x128xf32>
    %34 = arith.mulf %25, %9 : vector<1x128xf32>
    %35 = arith.mulf %19, %27 : vector<1x128xf32>
    %36 = arith.addf %34, %35 : vector<1x128xf32>
    %37 = math.tanh %36 : vector<1x128xf32>
    %38 = arith.mulf %33, %37 : vector<1x128xf32>
    %39 = vector.extract_strided_slice %7 {offsets = [1, 0], sizes = [1, 512], strides = [1, 1]} : vector<8x512xf32> to vector<1x512xf32>
    %c0_12 = arith.constant 0 : index
    %c0_13 = arith.constant 0 : index
    %40 = vector.load %arg2[%c0_12, %c0_13] : memref<128x512xf32, #tpu.memory_space<vmem>>, vector<128x512xf32>
    %cst_14 = arith.constant dense<0.000000e+00> : vector<1x512xf32>
    %41 = tpu.matmul %38, %40, %cst_14 {dimension_numbers = #tpu.dot_dimension_numbers<[1], [0], [0], [1], [0, 0, 1, 1], [], []>} : vector<1x128xf32>, vector<128x512xf32>, vector<1x512xf32> -> vector<1x512xf32>
    %42 = arith.addf %39, %41 : vector<1x512xf32>
    %43 = vector.extract_strided_slice %42 {offsets = [0, 0], sizes = [1, 128], strides = [1, 1]} : vector<1x512xf32> to vector<1x128xf32>
    %44 = arith.negf %43 : vector<1x128xf32>
    %45 = math.exp %44 : vector<1x128xf32>
    %cst_15 = arith.constant 1.000000e+00 : f32
    %46 = vector.broadcast %cst_15 : f32 to vector<1x128xf32>
    %47 = arith.addf %46, %45 : vector<1x128xf32>
    %48 = arith.divf %46, %47 : vector<1x128xf32>
    %49 = vector.extract_strided_slice %42 {offsets = [0, 128], sizes = [1, 128], strides = [1, 1]} : vector<1x512xf32> to vector<1x128xf32>
    %50 = arith.negf %49 : vector<1x128xf32>
    %51 = math.exp %50 : vector<1x128xf32>
    %cst_16 = arith.constant 1.000000e+00 : f32
    %52 = vector.broadcast %cst_16 : f32 to vector<1x128xf32>
    %53 = arith.addf %52, %51 : vector<1x128xf32>
    %54 = arith.divf %52, %53 : vector<1x128xf32>
    %55 = vector.extract_strided_slice %42 {offsets = [0, 256], sizes = [1, 128], strides = [1, 1]} : vector<1x512xf32> to vector<1x128xf32>
    %56 = math.tanh %55 : vector<1x128xf32>
    %57 = vector.extract_strided_slice %42 {offsets = [0, 384], sizes = [1, 128], strides = [1, 1]} : vector<1x512xf32> to vector<1x128xf32>
    %58 = arith.negf %57 : vector<1x128xf32>
    %59 = math.exp %58 : vector<1x128xf32>
    %cst_17 = arith.constant 1.000000e+00 : f32
    %60 = vector.broadcast %cst_17 : f32 to vector<1x128xf32>
    %61 = arith.addf %60, %59 : vector<1x128xf32>
    %62 = arith.divf %60, %61 : vector<1x128xf32>
    %63 = arith.mulf %54, %36 : vector<1x128xf32>
    %64 = arith.mulf %48, %56 : vector<1x128xf32>
    %65 = arith.addf %63, %64 : vector<1x128xf32>
    %66 = math.tanh %65 : vector<1x128xf32>
    %67 = arith.mulf %62, %66 : vector<1x128xf32>
    %68 = vector.extract_strided_slice %7 {offsets = [2, 0], sizes = [1, 512], strides = [1, 1]} : vector<8x512xf32> to vector<1x512xf32>
    %c0_18 = arith.constant 0 : index
    %c0_19 = arith.constant 0 : index
    %69 = vector.load %arg2[%c0_18, %c0_19] : memref<128x512xf32, #tpu.memory_space<vmem>>, vector<128x512xf32>
    %cst_20 = arith.constant dense<0.000000e+00> : vector<1x512xf32>
    %70 = tpu.matmul %67, %69, %cst_20 {dimension_numbers = #tpu.dot_dimension_numbers<[1], [0], [0], [1], [0, 0, 1, 1], [], []>} : vector<1x128xf32>, vector<128x512xf32>, vector<1x512xf32> -> vector<1x512xf32>
    %71 = arith.addf %68, %70 : vector<1x512xf32>
    %72 = vector.extract_strided_slice %71 {offsets = [0, 0], sizes = [1, 128], strides = [1, 1]} : vector<1x512xf32> to vector<1x128xf32>
    %73 = arith.negf %72 : vector<1x128xf32>
    %74 = math.exp %73 : vector<1x128xf32>
    %cst_21 = arith.constant 1.000000e+00 : f32
    %75 = vector.broadcast %cst_21 : f32 to vector<1x128xf32>
    %76 = arith.addf %75, %74 : vector<1x128xf32>
    %77 = arith.divf %75, %76 : vector<1x128xf32>
    %78 = vector.extract_strided_slice %71 {offsets = [0, 128], sizes = [1, 128], strides = [1, 1]} : vector<1x512xf32> to vector<1x128xf32>
    %79 = arith.negf %78 : vector<1x128xf32>
    %80 = math.exp %79 : vector<1x128xf32>
    %cst_22 = arith.constant 1.000000e+00 : f32
    %81 = vector.broadcast %cst_22 : f32 to vector<1x128xf32>
    %82 = arith.addf %81, %80 : vector<1x128xf32>
    %83 = arith.divf %81, %82 : vector<1x128xf32>
    %84 = vector.extract_strided_slice %71 {offsets = [0, 256], sizes = [1, 128], strides = [1, 1]} : vector<1x512xf32> to vector<1x128xf32>
    %85 = math.tanh %84 : vector<1x128xf32>
    %86 = vector.extract_strided_slice %71 {offsets = [0, 384], sizes = [1, 128], strides = [1, 1]} : vector<1x512xf32> to vector<1x128xf32>
    %87 = arith.negf %86 : vector<1x128xf32>
    %88 = math.exp %87 : vector<1x128xf32>
    %cst_23 = arith.constant 1.000000e+00 : f32
    %89 = vector.broadcast %cst_23 : f32 to vector<1x128xf32>
    %90 = arith.addf %89, %88 : vector<1x128xf32>
    %91 = arith.divf %89, %90 : vector<1x128xf32>
    %92 = arith.mulf %83, %65 : vector<1x128xf32>
    %93 = arith.mulf %77, %85 : vector<1x128xf32>
    %94 = arith.addf %92, %93 : vector<1x128xf32>
    %95 = math.tanh %94 : vector<1x128xf32>
    %96 = arith.mulf %91, %95 : vector<1x128xf32>
    %97 = vector.extract_strided_slice %7 {offsets = [3, 0], sizes = [1, 512], strides = [1, 1]} : vector<8x512xf32> to vector<1x512xf32>
    %c0_24 = arith.constant 0 : index
    %c0_25 = arith.constant 0 : index
    %98 = vector.load %arg2[%c0_24, %c0_25] : memref<128x512xf32, #tpu.memory_space<vmem>>, vector<128x512xf32>
    %cst_26 = arith.constant dense<0.000000e+00> : vector<1x512xf32>
    %99 = tpu.matmul %96, %98, %cst_26 {dimension_numbers = #tpu.dot_dimension_numbers<[1], [0], [0], [1], [0, 0, 1, 1], [], []>} : vector<1x128xf32>, vector<128x512xf32>, vector<1x512xf32> -> vector<1x512xf32>
    %100 = arith.addf %97, %99 : vector<1x512xf32>
    %101 = vector.extract_strided_slice %100 {offsets = [0, 0], sizes = [1, 128], strides = [1, 1]} : vector<1x512xf32> to vector<1x128xf32>
    %102 = arith.negf %101 : vector<1x128xf32>
    %103 = math.exp %102 : vector<1x128xf32>
    %cst_27 = arith.constant 1.000000e+00 : f32
    %104 = vector.broadcast %cst_27 : f32 to vector<1x128xf32>
    %105 = arith.addf %104, %103 : vector<1x128xf32>
    %106 = arith.divf %104, %105 : vector<1x128xf32>
    %107 = vector.extract_strided_slice %100 {offsets = [0, 128], sizes = [1, 128], strides = [1, 1]} : vector<1x512xf32> to vector<1x128xf32>
    %108 = arith.negf %107 : vector<1x128xf32>
    %109 = math.exp %108 : vector<1x128xf32>
    %cst_28 = arith.constant 1.000000e+00 : f32
    %110 = vector.broadcast %cst_28 : f32 to vector<1x128xf32>
    %111 = arith.addf %110, %109 : vector<1x128xf32>
    %112 = arith.divf %110, %111 : vector<1x128xf32>
    %113 = vector.extract_strided_slice %100 {offsets = [0, 256], sizes = [1, 128], strides = [1, 1]} : vector<1x512xf32> to vector<1x128xf32>
    %114 = math.tanh %113 : vector<1x128xf32>
    %115 = vector.extract_strided_slice %100 {offsets = [0, 384], sizes = [1, 128], strides = [1, 1]} : vector<1x512xf32> to vector<1x128xf32>
    %116 = arith.negf %115 : vector<1x128xf32>
    %117 = math.exp %116 : vector<1x128xf32>
    %cst_29 = arith.constant 1.000000e+00 : f32
    %118 = vector.broadcast %cst_29 : f32 to vector<1x128xf32>
    %119 = arith.addf %118, %117 : vector<1x128xf32>
    %120 = arith.divf %118, %119 : vector<1x128xf32>
    %121 = arith.mulf %112, %94 : vector<1x128xf32>
    %122 = arith.mulf %106, %114 : vector<1x128xf32>
    %123 = arith.addf %121, %122 : vector<1x128xf32>
    %124 = math.tanh %123 : vector<1x128xf32>
    %125 = arith.mulf %120, %124 : vector<1x128xf32>
    %126 = vector.extract_strided_slice %7 {offsets = [4, 0], sizes = [1, 512], strides = [1, 1]} : vector<8x512xf32> to vector<1x512xf32>
    %c0_30 = arith.constant 0 : index
    %c0_31 = arith.constant 0 : index
    %127 = vector.load %arg2[%c0_30, %c0_31] : memref<128x512xf32, #tpu.memory_space<vmem>>, vector<128x512xf32>
    %cst_32 = arith.constant dense<0.000000e+00> : vector<1x512xf32>
    %128 = tpu.matmul %125, %127, %cst_32 {dimension_numbers = #tpu.dot_dimension_numbers<[1], [0], [0], [1], [0, 0, 1, 1], [], []>} : vector<1x128xf32>, vector<128x512xf32>, vector<1x512xf32> -> vector<1x512xf32>
    %129 = arith.addf %126, %128 : vector<1x512xf32>
    %130 = vector.extract_strided_slice %129 {offsets = [0, 0], sizes = [1, 128], strides = [1, 1]} : vector<1x512xf32> to vector<1x128xf32>
    %131 = arith.negf %130 : vector<1x128xf32>
    %132 = math.exp %131 : vector<1x128xf32>
    %cst_33 = arith.constant 1.000000e+00 : f32
    %133 = vector.broadcast %cst_33 : f32 to vector<1x128xf32>
    %134 = arith.addf %133, %132 : vector<1x128xf32>
    %135 = arith.divf %133, %134 : vector<1x128xf32>
    %136 = vector.extract_strided_slice %129 {offsets = [0, 128], sizes = [1, 128], strides = [1, 1]} : vector<1x512xf32> to vector<1x128xf32>
    %137 = arith.negf %136 : vector<1x128xf32>
    %138 = math.exp %137 : vector<1x128xf32>
    %cst_34 = arith.constant 1.000000e+00 : f32
    %139 = vector.broadcast %cst_34 : f32 to vector<1x128xf32>
    %140 = arith.addf %139, %138 : vector<1x128xf32>
    %141 = arith.divf %139, %140 : vector<1x128xf32>
    %142 = vector.extract_strided_slice %129 {offsets = [0, 256], sizes = [1, 128], strides = [1, 1]} : vector<1x512xf32> to vector<1x128xf32>
    %143 = math.tanh %142 : vector<1x128xf32>
    %144 = vector.extract_strided_slice %129 {offsets = [0, 384], sizes = [1, 128], strides = [1, 1]} : vector<1x512xf32> to vector<1x128xf32>
    %145 = arith.negf %144 : vector<1x128xf32>
    %146 = math.exp %145 : vector<1x128xf32>
    %cst_35 = arith.constant 1.000000e+00 : f32
    %147 = vector.broadcast %cst_35 : f32 to vector<1x128xf32>
    %148 = arith.addf %147, %146 : vector<1x128xf32>
    %149 = arith.divf %147, %148 : vector<1x128xf32>
    %150 = arith.mulf %141, %123 : vector<1x128xf32>
    %151 = arith.mulf %135, %143 : vector<1x128xf32>
    %152 = arith.addf %150, %151 : vector<1x128xf32>
    %153 = math.tanh %152 : vector<1x128xf32>
    %154 = arith.mulf %149, %153 : vector<1x128xf32>
    %155 = vector.extract_strided_slice %7 {offsets = [5, 0], sizes = [1, 512], strides = [1, 1]} : vector<8x512xf32> to vector<1x512xf32>
    %c0_36 = arith.constant 0 : index
    %c0_37 = arith.constant 0 : index
    %156 = vector.load %arg2[%c0_36, %c0_37] : memref<128x512xf32, #tpu.memory_space<vmem>>, vector<128x512xf32>
    %cst_38 = arith.constant dense<0.000000e+00> : vector<1x512xf32>
    %157 = tpu.matmul %154, %156, %cst_38 {dimension_numbers = #tpu.dot_dimension_numbers<[1], [0], [0], [1], [0, 0, 1, 1], [], []>} : vector<1x128xf32>, vector<128x512xf32>, vector<1x512xf32> -> vector<1x512xf32>
    %158 = arith.addf %155, %157 : vector<1x512xf32>
    %159 = vector.extract_strided_slice %158 {offsets = [0, 0], sizes = [1, 128], strides = [1, 1]} : vector<1x512xf32> to vector<1x128xf32>
    %160 = arith.negf %159 : vector<1x128xf32>
    %161 = math.exp %160 : vector<1x128xf32>
    %cst_39 = arith.constant 1.000000e+00 : f32
    %162 = vector.broadcast %cst_39 : f32 to vector<1x128xf32>
    %163 = arith.addf %162, %161 : vector<1x128xf32>
    %164 = arith.divf %162, %163 : vector<1x128xf32>
    %165 = vector.extract_strided_slice %158 {offsets = [0, 128], sizes = [1, 128], strides = [1, 1]} : vector<1x512xf32> to vector<1x128xf32>
    %166 = arith.negf %165 : vector<1x128xf32>
    %167 = math.exp %166 : vector<1x128xf32>
    %cst_40 = arith.constant 1.000000e+00 : f32
    %168 = vector.broadcast %cst_40 : f32 to vector<1x128xf32>
    %169 = arith.addf %168, %167 : vector<1x128xf32>
    %170 = arith.divf %168, %169 : vector<1x128xf32>
    %171 = vector.extract_strided_slice %158 {offsets = [0, 256], sizes = [1, 128], strides = [1, 1]} : vector<1x512xf32> to vector<1x128xf32>
    %172 = math.tanh %171 : vector<1x128xf32>
    %173 = vector.extract_strided_slice %158 {offsets = [0, 384], sizes = [1, 128], strides = [1, 1]} : vector<1x512xf32> to vector<1x128xf32>
    %174 = arith.negf %173 : vector<1x128xf32>
    %175 = math.exp %174 : vector<1x128xf32>
    %cst_41 = arith.constant 1.000000e+00 : f32
    %176 = vector.broadcast %cst_41 : f32 to vector<1x128xf32>
    %177 = arith.addf %176, %175 : vector<1x128xf32>
    %178 = arith.divf %176, %177 : vector<1x128xf32>
    %179 = arith.mulf %170, %152 : vector<1x128xf32>
    %180 = arith.mulf %164, %172 : vector<1x128xf32>
    %181 = arith.addf %179, %180 : vector<1x128xf32>
    %182 = math.tanh %181 : vector<1x128xf32>
    %183 = arith.mulf %178, %182 : vector<1x128xf32>
    %184 = vector.extract_strided_slice %7 {offsets = [6, 0], sizes = [1, 512], strides = [1, 1]} : vector<8x512xf32> to vector<1x512xf32>
    %c0_42 = arith.constant 0 : index
    %c0_43 = arith.constant 0 : index
    %185 = vector.load %arg2[%c0_42, %c0_43] : memref<128x512xf32, #tpu.memory_space<vmem>>, vector<128x512xf32>
    %cst_44 = arith.constant dense<0.000000e+00> : vector<1x512xf32>
    %186 = tpu.matmul %183, %185, %cst_44 {dimension_numbers = #tpu.dot_dimension_numbers<[1], [0], [0], [1], [0, 0, 1, 1], [], []>} : vector<1x128xf32>, vector<128x512xf32>, vector<1x512xf32> -> vector<1x512xf32>
    %187 = arith.addf %184, %186 : vector<1x512xf32>
    %188 = vector.extract_strided_slice %187 {offsets = [0, 0], sizes = [1, 128], strides = [1, 1]} : vector<1x512xf32> to vector<1x128xf32>
    %189 = arith.negf %188 : vector<1x128xf32>
    %190 = math.exp %189 : vector<1x128xf32>
    %cst_45 = arith.constant 1.000000e+00 : f32
    %191 = vector.broadcast %cst_45 : f32 to vector<1x128xf32>
    %192 = arith.addf %191, %190 : vector<1x128xf32>
    %193 = arith.divf %191, %192 : vector<1x128xf32>
    %194 = vector.extract_strided_slice %187 {offsets = [0, 128], sizes = [1, 128], strides = [1, 1]} : vector<1x512xf32> to vector<1x128xf32>
    %195 = arith.negf %194 : vector<1x128xf32>
    %196 = math.exp %195 : vector<1x128xf32>
    %cst_46 = arith.constant 1.000000e+00 : f32
    %197 = vector.broadcast %cst_46 : f32 to vector<1x128xf32>
    %198 = arith.addf %197, %196 : vector<1x128xf32>
    %199 = arith.divf %197, %198 : vector<1x128xf32>
    %200 = vector.extract_strided_slice %187 {offsets = [0, 256], sizes = [1, 128], strides = [1, 1]} : vector<1x512xf32> to vector<1x128xf32>
    %201 = math.tanh %200 : vector<1x128xf32>
    %202 = vector.extract_strided_slice %187 {offsets = [0, 384], sizes = [1, 128], strides = [1, 1]} : vector<1x512xf32> to vector<1x128xf32>
    %203 = arith.negf %202 : vector<1x128xf32>
    %204 = math.exp %203 : vector<1x128xf32>
    %cst_47 = arith.constant 1.000000e+00 : f32
    %205 = vector.broadcast %cst_47 : f32 to vector<1x128xf32>
    %206 = arith.addf %205, %204 : vector<1x128xf32>
    %207 = arith.divf %205, %206 : vector<1x128xf32>
    %208 = arith.mulf %199, %181 : vector<1x128xf32>
    %209 = arith.mulf %193, %201 : vector<1x128xf32>
    %210 = arith.addf %208, %209 : vector<1x128xf32>
    %211 = math.tanh %210 : vector<1x128xf32>
    %212 = arith.mulf %207, %211 : vector<1x128xf32>
    %213 = vector.extract_strided_slice %7 {offsets = [7, 0], sizes = [1, 512], strides = [1, 1]} : vector<8x512xf32> to vector<1x512xf32>
    %c0_48 = arith.constant 0 : index
    %c0_49 = arith.constant 0 : index
    %214 = vector.load %arg2[%c0_48, %c0_49] : memref<128x512xf32, #tpu.memory_space<vmem>>, vector<128x512xf32>
    %cst_50 = arith.constant dense<0.000000e+00> : vector<1x512xf32>
    %215 = tpu.matmul %212, %214, %cst_50 {dimension_numbers = #tpu.dot_dimension_numbers<[1], [0], [0], [1], [0, 0, 1, 1], [], []>} : vector<1x128xf32>, vector<128x512xf32>, vector<1x512xf32> -> vector<1x512xf32>
    %216 = arith.addf %213, %215 : vector<1x512xf32>
    %217 = vector.extract_strided_slice %216 {offsets = [0, 0], sizes = [1, 128], strides = [1, 1]} : vector<1x512xf32> to vector<1x128xf32>
    %218 = arith.negf %217 : vector<1x128xf32>
    %219 = math.exp %218 : vector<1x128xf32>
    %cst_51 = arith.constant 1.000000e+00 : f32
    %220 = vector.broadcast %cst_51 : f32 to vector<1x128xf32>
    %221 = arith.addf %220, %219 : vector<1x128xf32>
    %222 = arith.divf %220, %221 : vector<1x128xf32>
    %223 = vector.extract_strided_slice %216 {offsets = [0, 128], sizes = [1, 128], strides = [1, 1]} : vector<1x512xf32> to vector<1x128xf32>
    %224 = arith.negf %223 : vector<1x128xf32>
    %225 = math.exp %224 : vector<1x128xf32>
    %cst_52 = arith.constant 1.000000e+00 : f32
    %226 = vector.broadcast %cst_52 : f32 to vector<1x128xf32>
    %227 = arith.addf %226, %225 : vector<1x128xf32>
    %228 = arith.divf %226, %227 : vector<1x128xf32>
    %229 = vector.extract_strided_slice %216 {offsets = [0, 256], sizes = [1, 128], strides = [1, 1]} : vector<1x512xf32> to vector<1x128xf32>
    %230 = math.tanh %229 : vector<1x128xf32>
    %231 = vector.extract_strided_slice %216 {offsets = [0, 384], sizes = [1, 128], strides = [1, 1]} : vector<1x512xf32> to vector<1x128xf32>
    %232 = arith.negf %231 : vector<1x128xf32>
    %233 = math.exp %232 : vector<1x128xf32>
    %cst_53 = arith.constant 1.000000e+00 : f32
    %234 = vector.broadcast %cst_53 : f32 to vector<1x128xf32>
    %235 = arith.addf %234, %233 : vector<1x128xf32>
    %236 = arith.divf %234, %235 : vector<1x128xf32>
    %237 = arith.mulf %228, %210 : vector<1x128xf32>
    %238 = arith.mulf %222, %230 : vector<1x128xf32>
    %239 = arith.addf %237, %238 : vector<1x128xf32>
    %240 = math.tanh %239 : vector<1x128xf32>
    %241 = arith.mulf %236, %240 : vector<1x128xf32>
    %242 = tpu.concatenate %38, %67, %96, %125, %154, %183, %212, %241 in 0 : vector<1x128xf32>, vector<1x128xf32>, vector<1x128xf32>, vector<1x128xf32>, vector<1x128xf32>, vector<1x128xf32>, vector<1x128xf32>, vector<1x128xf32> -> vector<8x128xf32>
    %c0_54 = arith.constant 0 : index
    %c0_55 = arith.constant 0 : index
    %243 = vector.load %arg4[%c0_54, %c0_55] : memref<1x128xf32, #tpu.memory_space<vmem>>, vector<1x128xf32>
    %244 = vector.broadcast %243 : vector<1x128xf32> to vector<8x128xf32>
    %245 = arith.mulf %242, %244 : vector<8x128xf32>
    %cst_56 = arith.constant dense<0.000000e+00> : vector<8xf32>
    %246 = vector.multi_reduction <add>, %245, %cst_56 [1] : vector<8x128xf32> to vector<8xf32>
    %247 = vector.shape_cast %246 : vector<8xf32> to vector<8x1xf32>
    %c0_57 = arith.constant 0 : index
    %c0_58 = arith.constant 0 : index
    %248 = vector.load %arg5[%c0_57, %c0_58] : memref<1x1xf32, #tpu.memory_space<vmem>>, vector<1x1xf32>
    %249 = vector.broadcast %248 : vector<1x1xf32> to vector<8x1xf32>
    %250 = arith.addf %247, %249 : vector<8x1xf32>
    %251 = math.tanh %250 : vector<8x1xf32>
    %c0_59 = arith.constant 0 : index
    %c0_60 = arith.constant 0 : index
    %252 = vector.load %arg6[%c0_59, %c0_60] : memref<8x1xf32, #tpu.memory_space<vmem>>, vector<8x1xf32>
    tpu.vector_store %arg6[%c0_59, %c0_60], %251 {strides = array<i32>} : memref<8x1xf32, #tpu.memory_space<vmem>>, vector<8x1xf32>,
    return
  }
}

</mosaic_0001>

<llo_original>
// kernel: lstm_forward_pallas.1
$region0: #{lstm_forward_pallas.1}
  #allocation0 [shape = 'u32[]', space=smem, size = 0x4, offset = 0x4, fixed_abs, tag = 'smem constant byte address 0x4 - core index']
  #allocation1 [shape = 'u32[144,128]{1,0:T(1,128)}', space=vmem, size = 0x12000, scoped, tag = 'internal scratch']
  #allocation2 [shape = 'f32[1,1]{1,0:T(1,128)S(1)}', space=vmem, size = 0x200, scoped, tag = 'scoped memory for lstm_forward_pallas.1']
  %s0 = inlined_call_operand.vmem [shape: f32[8,1], index: 0, kind: input, shape index: {}]
  %s1 = inlined_call_operand.vmem [shape: f32[1,512], index: 1, kind: input, shape index: {}]
  %s2 = inlined_call_operand.vmem [shape: f32[128,512], index: 2, kind: input, shape index: {}]
  %s3 = inlined_call_operand.vmem [shape: f32[1,512], index: 3, kind: input, shape index: {}]
  %s4 = inlined_call_operand.vmem [shape: f32[1,128], index: 4, kind: input, shape index: {}]
  %s5 = inlined_call_operand.<no memory space> [shape: f32[1,1], index: 5, kind: input, shape index: {}]
  %s6 = inlined_call_operand.vmem [shape: f32[8,1], index: 6, kind: output, shape index: {}]
  %s7 = sld [smem:[#allocation0]]
  $region34: #{lstm_forward_pallas.1} parent=0
    _
  %s9 = ssub.s32 1, %s7
  %s10 = scalar_select 0, %s9, %s7
  %v11 = vstv %s5
  %12 = vst [vmem:[#allocation2] sm:$0x1] %v11
  // Predicated region
  $region2: #{lstm_forward_pallas.1} parent=0 // pred_check
    _
  $region3: #{lstm_forward_pallas.1} parent=0 // pred_check_branch
    %14 = sbr.rel (0) target = $region5
  $region4: #{lstm_forward_pallas.1} parent=0 // pred_region
    _
  $region5: #{lstm_forward_pallas.1} parent=0 // pred_fallthru
    _
  // Predicated region
  $region6: #{lstm_forward_pallas.1} parent=0 // pred_check
    _
  $region7: #{lstm_forward_pallas.1} parent=0 // pred_check_branch
    %16 = sbr.rel (0) target = $region9
  $region8: #{lstm_forward_pallas.1} parent=0 // pred_region
    _
  $region9: #{lstm_forward_pallas.1} parent=0 // pred_fallthru
    _
  // Predicated region
  $region10: #{lstm_forward_pallas.1} parent=0 // pred_check
    _
  $region11: #{lstm_forward_pallas.1} parent=0 // pred_check_branch
    %18 = sbr.rel (0) target = $region13
  $region12: #{lstm_forward_pallas.1} parent=0 // pred_region
    _
  $region13: #{lstm_forward_pallas.1} parent=0 // pred_fallthru
    _
  // Predicated region
  $region14: #{lstm_forward_pallas.1} parent=0 // pred_check
    _
  $region15: #{lstm_forward_pallas.1} parent=0 // pred_check_branch
    %20 = sbr.rel (0) target = $region17
  $region16: #{lstm_forward_pallas.1} parent=0 // pred_region
    _
  $region17: #{lstm_forward_pallas.1} parent=0 // pred_fallthru
    _
  // Predicated region
  $region18: #{lstm_forward_pallas.1} parent=0 // pred_check
    _
  $region19: #{lstm_forward_pallas.1} parent=0 // pred_check_branch
    %22 = sbr.rel (0) target = $region21
  $region20: #{lstm_forward_pallas.1} parent=0 // pred_region
    _
  $region21: #{lstm_forward_pallas.1} parent=0 // pred_fallthru
    _
  // Predicated region
  $region22: #{lstm_forward_pallas.1} parent=0 // pred_check
    _
  $region23: #{lstm_forward_pallas.1} parent=0 // pred_check_branch
    %24 = sbr.rel (0) target = $region25
  $region24: #{lstm_forward_pallas.1} parent=0 // pred_region
    _
  $region25: #{lstm_forward_pallas.1} parent=0 // pred_fallthru
    _
  %v25 = vld [vmem:[%s0] sm:$0xff]
  %v26 = vld [vmem:[%s1] sm:$0xf]
  %28 = vset.pattern.permute.xlu0 0
  %29 = vperm.xlu0 %28, %v25
  %v30 = vpop.permute.xlu0 %29
  %v33 = vlaneseq
  %v34 = vshrl.u32 %v33, 7
  %v35 = vsub.s32 0, %v34
  %v36 = vrot.slane %v26, %v35
  %v37 = vlaneseq
  %v38 = vshrl.u32 %v37, 7
  %v39 = vsub.s32 1, %v38
  %v40 = vrot.slane %v26, %v39
  %v41 = vlaneseq
  %v42 = vshrl.u32 %v41, 7
  %v43 = vsub.s32 2, %v42
  %v44 = vrot.slane %v26, %v43
  %v45 = vlaneseq
  %v46 = vshrl.u32 %v45, 7
  %v47 = vsub.s32 3, %v46
  %v48 = vrot.slane %v26, %v47
  %v53 = vmul.f32 %v30, %v36
  %v54 = vmul.f32 %v30, %v40
  %v55 = vmul.f32 %v30, %v44
  %v56 = vmul.f32 %v30, %v48
  %v57 = vld [vmem:[%s3] sm:$0xf]
  %v59 = vlaneseq
  %v60 = vshrl.u32 %v59, 7
  %v61 = vsub.s32 0, %v60
  %v62 = vrot.slane %v57, %v61
  %v63 = vlaneseq
  %v64 = vshrl.u32 %v63, 7
  %v65 = vsub.s32 1, %v64
  %v66 = vrot.slane %v57, %v65
  %v67 = vlaneseq
  %v68 = vshrl.u32 %v67, 7
  %v69 = vsub.s32 2, %v68
  %v70 = vrot.slane %v57, %v69
  %v71 = vlaneseq
  %v72 = vshrl.u32 %v71, 7
  %v73 = vsub.s32 3, %v72
  %v74 = vrot.slane %v57, %v73
  %v79 = vadd.f32 %v53, %v62
  %v80 = vadd.f32 %v54, %v66
  %v81 = vadd.f32 %v55, %v70
  %v82 = vadd.f32 %v56, %v74
  %v83 = vld [vmem:[%s2] sm:$0xff]
  %v84 = vld [vmem:[%s2 + $0x8] sm:$0xff]
  %v85 = vld [vmem:[%s2 + $0x10] sm:$0xff]
  %v86 = vld [vmem:[%s2 + $0x18] sm:$0xff]
  %v87 = vld [vmem:[%s2 + $0x20] sm:$0xff]
  %v88 = vld [vmem:[%s2 + $0x28] sm:$0xff]
  %v89 = vld [vmem:[%s2 + $0x30] sm:$0xff]
  %v90 = vld [vmem:[%s2 + $0x38] sm:$0xff]
  %v91 = vld [vmem:[%s2 + $0x40] sm:$0xff]
  %v92 = vld [vmem:[%s2 + $0x48] sm:$0xff]
  %v93 = vld [vmem:[%s2 + $0x50] sm:$0xff]
  %v94 = vld [vmem:[%s2 + $0x58] sm:$0xff]
  %v95 = vld [vmem:[%s2 + $0x60] sm:$0xff]
  %v96 = vld [vmem:[%s2 + $0x68] sm:$0xff]
  %v97 = vld [vmem:[%s2 + $0x70] sm:$0xff]
  %v98 = vld [vmem:[%s2 + $0x78] sm:$0xff]
  %v99 = vld [vmem:[%s2 + $0x80] sm:$0xff]
  %v100 = vld [vmem:[%s2 + $0x88] sm:$0xff]
  %v101 = vld [vmem:[%s2 + $0x90] sm:$0xff]
  %v102 = vld [vmem:[%s2 + $0x98] sm:$0xff]
  %v103 = vld [vmem:[%s2 + $0xa0] sm:$0xff]
  %v104 = vld [vmem:[%s2 + $0xa8] sm:$0xff]
  %v105 = vld [vmem:[%s2 + $0xb0] sm:$0xff]
  %v106 = vld [vmem:[%s2 + $0xb8] sm:$0xff]
  %v107 = vld [vmem:[%s2 + $0xc0] sm:$0xff]
  %v108 = vld [vmem:[%s2 + $0xc8] sm:$0xff]
  %v109 = vld [vmem:[%s2 + $0xd0] sm:$0xff]
  %v110 = vld [vmem:[%s2 + $0xd8] sm:$0xff]
  %v111 = vld [vmem:[%s2 + $0xe0] sm:$0xff]
  %v112 = vld [vmem:[%s2 + $0xe8] sm:$0xff]
  %v113 = vld [vmem:[%s2 + $0xf0] sm:$0xff]
  %v114 = vld [vmem:[%s2 + $0xf8] sm:$0xff]
  %v115 = vld [vmem:[%s2 + $0x100] sm:$0xff]
  %v116 = vld [vmem:[%s2 + $0x108] sm:$0xff]
  %v117 = vld [vmem:[%s2 + $0x110] sm:$0xff]
  %v118 = vld [vmem:[%s2 + $0x118] sm:$0xff]
  %v119 = vld [vmem:[%s2 + $0x120] sm:$0xff]
  %v120 = vld [vmem:[%s2 + $0x128] sm:$0xff]
  %v121 = vld [vmem:[%s2 + $0x130] sm:$0xff]
  %v122 = vld [vmem:[%s2 + $0x138] sm:$0xff]
  %v123 = vld [vmem:[%s2 + $0x140] sm:$0xff]
  %v124 = vld [vmem:[%s2 + $0x148] sm:$0xff]
  %v125 = vld [vmem:[%s2 + $0x150] sm:$0xff]
  %v126 = vld [vmem:[%s2 + $0x158] sm:$0xff]
  %v127 = vld [vmem:[%s2 + $0x160] sm:$0xff]
  %v128 = vld [vmem:[%s2 + $0x168] sm:$0xff]
  %v129 = vld [vmem:[%s2 + $0x170] sm:$0xff]
  %v130 = vld [vmem:[%s2 + $0x178] sm:$0xff]
  %v131 = vld [vmem:[%s2 + $0x180] sm:$0xff]
  %v132 = vld [vmem:[%s2 + $0x188] sm:$0xff]
  %v133 = vld [vmem:[%s2 + $0x190] sm:$0xff]
  %v134 = vld [vmem:[%s2 + $0x198] sm:$0xff]
  %v135 = vld [vmem:[%s2 + $0x1a0] sm:$0xff]
  %v136 = vld [vmem:[%s2 + $0x1a8] sm:$0xff]
  %v137 = vld [vmem:[%s2 + $0x1b0] sm:$0xff]
  %v138 = vld [vmem:[%s2 + $0x1b8] sm:$0xff]
  %v139 = vld [vmem:[%s2 + $0x1c0] sm:$0xff]
  %v140 = vld [vmem:[%s2 + $0x1c8] sm:$0xff]
  %v141 = vld [vmem:[%s2 + $0x1d0] sm:$0xff]
  %v142 = vld [vmem:[%s2 + $0x1d8] sm:$0xff]
  %v143 = vld [vmem:[%s2 + $0x1e0] sm:$0xff]
  %v144 = vld [vmem:[%s2 + $0x1e8] sm:$0xff]
  %v145 = vld [vmem:[%s2 + $0x1f0] sm:$0xff]
  %v146 = vld [vmem:[%s2 + $0x1f8] sm:$0xff]
  %147 = vmatprep.subr.mxu0 %v84
  %148 = vmatpush1.msra.mxu0 %v83
  %149 = vmatprep.subr.mxu0 %v88
  %150 = vmatpush1.msra.mxu0 %v87
  %151 = vmatprep.subr.mxu0 %v92
  %152 = vmatpush1.msra.mxu0 %v91
  %153 = vmatprep.subr.mxu0 %v96
  %154 = vmatpush1.msra.mxu0 %v95
  %155 = vmatprep.subr.mxu0 %v100
  %156 = vmatpush1.msra.mxu0 %v99
  %157 = vmatprep.subr.mxu0 %v104
  %158 = vmatpush1.msra.mxu0 %v103
  %159 = vmatprep.subr.mxu0 %v108
  %160 = vmatpush1.msra.mxu0 %v107
  %161 = vmatprep.subr.mxu0 %v112
  %162 = vmatpush1.msra.mxu0 %v111
  %163 = vmatprep.subr.mxu0 %v116
  %164 = vmatpush1.msra.mxu0 %v115
  %165 = vmatprep.subr.mxu0 %v120
  %166 = vmatpush1.msra.mxu0 %v119
  %167 = vmatprep.subr.mxu0 %v124
  %168 = vmatpush1.msra.mxu0 %v123
  %169 = vmatprep.subr.mxu0 %v128
  %170 = vmatpush1.msra.mxu0 %v127
  %171 = vmatprep.subr.mxu0 %v132
  %172 = vmatpush1.msra.mxu0 %v131
  %173 = vmatprep.subr.mxu0 %v136
  %174 = vmatpush1.msra.mxu0 %v135
  %175 = vmatprep.subr.mxu0 %v140
  %176 = vmatpush1.msra.mxu0 %v139
  %177 = vmatprep.subr.mxu0 %v144
  %178 = vmatpush1.msra.mxu0 %v143
  %179 = vmatprep.subr.mxu0 0.0
  %180 = vmatpush1.msra.mxu0 0.0
  %181 = vmatprep.subr.mxu0 0.0
  %182 = vmatpush1.msra.mxu0 0.0
  %183 = vmatprep.subr.mxu0 0.0
  %184 = vmatpush1.msra.mxu0 0.0
  %185 = vmatprep.subr.mxu0 0.0
  %186 = vmatpush1.msra.mxu0 0.0
  %187 = vmatprep.subr.mxu0 0.0
  %188 = vmatpush1.msra.mxu0 0.0
  %189 = vmatprep.subr.mxu0 0.0
  %190 = vmatpush1.msra.mxu0 0.0
  %191 = vmatprep.subr.mxu0 0.0
  %192 = vmatpush1.msra.mxu0 0.0
  %193 = vmatprep.subr.mxu0 0.0
  %194 = vmatpush1.msra.mxu0 0.0
  %195 = vmatprep.subr.mxu0 0.0
  %196 = vmatpush1.msra.mxu0 0.0
  %197 = vmatprep.subr.mxu0 0.0
  %198 = vmatpush1.msra.mxu0 0.0
  %199 = vmatprep.subr.mxu0 0.0
  %200 = vmatpush1.msra.mxu0 0.0
  %201 = vmatprep.subr.mxu0 0.0
  %202 = vmatpush1.msra.mxu0 0.0
  %203 = vmatprep.subr.mxu0 0.0
  %204 = vmatpush1.msra.mxu0 0.0
  %205 = vmatprep.subr.mxu0 0.0
  %206 = vmatpush1.msra.mxu0 0.0
  %207 = vmatprep.subr.mxu0 0.0
  %208 = vmatpush1.msra.mxu0 0.0
  %209 = vmatprep.subr.mxu0 0.0
  %210 = vmatpush1.msra.mxu0 0.0
  %211 = vmatprep.mubr.f32.mxu0 0.0
  %212 = vmatmul.mubr.f32.gmra.mrb[0].mxu0 0.0
  %v213 = vpop.f32.mrb[0].mxu0
  %v214 = vadd.f32 0.0, %v213
  %v215 = vpop.f32.mrb[0].mxu0
  %v216 = vadd.f32 0.0, %v215
  %217 = vdwg.mxu0
  %218 = vmatprep.subr.mxu0 %v86
  %219 = vmatpush1.msra.mxu0 %v85
  %220 = vmatprep.subr.mxu0 %v90
  %221 = vmatpush1.msra.mxu0 %v89
  %222 = vmatprep.subr.mxu0 %v94
  %223 = vmatpush1.msra.mxu0 %v93
  %224 = vmatprep.subr.mxu0 %v98
  %225 = vmatpush1.msra.mxu0 %v97
  %226 = vmatprep.subr.mxu0 %v102
  %227 = vmatpush1.msra.mxu0 %v101
  %228 = vmatprep.subr.mxu0 %v106
  %229 = vmatpush1.msra.mxu0 %v105
  %230 = vmatprep.subr.mxu0 %v110
  %231 = vmatpush1.msra.mxu0 %v109
  %232 = vmatprep.subr.mxu0 %v114
  %233 = vmatpush1.msra.mxu0 %v113
  %234 = vmatprep.subr.mxu0 %v118
  %235 = vmatpush1.msra.mxu0 %v117
  %236 = vmatprep.subr.mxu0 %v122
  %237 = vmatpush1.msra.mxu0 %v121
  %238 = vmatprep.subr.mxu0 %v126
  %239 = vmatpush1.msra.mxu0 %v125
  %240 = vmatprep.subr.mxu0 %v130
  %241 = vmatpush1.msra.mxu0 %v129
  %242 = vmatprep.subr.mxu0 %v134
  %243 = vmatpush1.msra.mxu0 %v133
  %244 = vmatprep.subr.mxu0 %v138
  %245 = vmatpush1.msra.mxu0 %v137
  %246 = vmatprep.subr.mxu0 %v142
  %247 = vmatpush1.msra.mxu0 %v141
  %248 = vmatprep.subr.mxu0 %v146
  %249 = vmatpush1.msra.mxu0 %v145
  %250 = vmatprep.subr.mxu0 0.0
  %251 = vmatpush1.msra.mxu0 0.0
  %252 = vmatprep.subr.mxu0 0.0
  %253 = vmatpush1.msra.mxu0 0.0
  %254 = vmatprep.subr.mxu0 0.0
  %255 = vmatpush1.msra.mxu0 0.0
  %256 = vmatprep.subr.mxu0 0.0
  %257 = vmatpush1.msra.mxu0 0.0
  %258 = vmatprep.subr.mxu0 0.0
  %259 = vmatpush1.msra.mxu0 0.0
  %260 = vmatprep.subr.mxu0 0.0
  %261 = vmatpush1.msra.mxu0 0.0
  %262 = vmatprep.subr.mxu0 0.0
  %263 = vmatpush1.msra.mxu0 0.0
  %264 = vmatprep.subr.mxu0 0.0
  %265 = vmatpush1.msra.mxu0 0.0
  %266 = vmatprep.subr.mxu0 0.0
  %267 = vmatpush1.msra.mxu0 0.0
  %268 = vmatprep.subr.mxu0 0.0
  %269 = vmatpush1.msra.mxu0 0.0
  %270 = vmatprep.subr.mxu0 0.0
  %271 = vmatpush1.msra.mxu0 0.0
  %272 = vmatprep.subr.mxu0 0.0
  %273 = vmatpush1.msra.mxu0 0.0
  %274 = vmatprep.subr.mxu0 0.0
  %275 = vmatpush1.msra.mxu0 0.0
  %276 = vmatprep.subr.mxu0 0.0
  %277 = vmatpush1.msra.mxu0 0.0
  %278 = vmatprep.subr.mxu0 0.0
  %279 = vmatpush1.msra.mxu0 0.0
  %280 = vmatprep.subr.mxu0 0.0
  %281 = vmatpush1.msra.mxu0 0.0
  %282 = vmatprep.mubr.f32.mxu0 0.0
  %283 = vmatmul.mubr.f32.gmra.mrb[0].mxu0 0.0
  %v284 = vpop.f32.mrb[0].mxu0
  %v285 = vadd.f32 0.0, %v284
  %v286 = vpop.f32.mrb[0].mxu0
  %v287 = vadd.f32 0.0, %v286
  %288 = vdwg.mxu0
  %v289 = vadd.f32 %v79, %v214
  %v290 = vadd.f32 %v80, %v216
  %v291 = vadd.f32 %v81, %v285
  %v292 = vadd.f32 %v82, %v287
  %v293 = vxor.u32 %v289, 2147483648
  %v294 = vmul.f32 %v293, 1.442695
  %v295 = vpow.pop %v294
  %v296 = vadd.f32 %v295, 1.0
  %v297 = vrcp.pop %v296
  %v298 = vmul.f32 1.0, %v297
  %v299 = vxor.u32 %v290, 2147483648
  %v300 = vmul.f32 %v299, 1.442695
  %v301 = vpow.pop %v300
  %v302 = vadd.f32 %v301, 1.0
  %v303 = vrcp.pop %v302
  %v304 = vmul.f32 1.0, %v303
  %v305 = vtanh.pop %v291
  %v306 = vxor.u32 %v292, 2147483648
  %v307 = vmul.f32 %v306, 1.442695
  %v308 = vpow.pop %v307
  %v309 = vadd.f32 %v308, 1.0
  %v310 = vrcp.pop %v309
  %v311 = vmul.f32 1.0, %v310
  %v312 = vmul.f32 %v304, 0.0
  %v313 = vmul.f32 %v298, %v305
  %v314 = vadd.f32 %v312, %v313
  %v315 = vtanh.pop %v314
  %v316 = vmul.f32 %v311, %v315
  %317 = vmatprep.subr.mxu0 %v84
  %318 = vmatpush1.msra.mxu0 %v83
  %319 = vmatprep.subr.mxu0 %v88
  %320 = vmatpush1.msra.mxu0 %v87
  %321 = vmatprep.subr.mxu0 %v92
  %322 = vmatpush1.msra.mxu0 %v91
  %323 = vmatprep.subr.mxu0 %v96
  %324 = vmatpush1.msra.mxu0 %v95
  %325 = vmatprep.subr.mxu0 %v100
  %326 = vmatpush1.msra.mxu0 %v99
  %327 = vmatprep.subr.mxu0 %v104
  %328 = vmatpush1.msra.mxu0 %v103
  %329 = vmatprep.subr.mxu0 %v108
  %330 = vmatpush1.msra.mxu0 %v107
  %331 = vmatprep.subr.mxu0 %v112
  %332 = vmatpush1.msra.mxu0 %v111
  %333 = vmatprep.subr.mxu0 %v116
  %334 = vmatpush1.msra.mxu0 %v115
  %335 = vmatprep.subr.mxu0 %v120
  %336 = vmatpush1.msra.mxu0 %v119
  %337 = vmatprep.subr.mxu0 %v124
  %338 = vmatpush1.msra.mxu0 %v123
  %339 = vmatprep.subr.mxu0 %v128
  %340 = vmatpush1.msra.mxu0 %v127
  %341 = vmatprep.subr.mxu0 %v132
  %342 = vmatpush1.msra.mxu0 %v131
  %343 = vmatprep.subr.mxu0 %v136
  %344 = vmatpush1.msra.mxu0 %v135
  %345 = vmatprep.subr.mxu0 %v140
  %346 = vmatpush1.msra.mxu0 %v139
  %347 = vmatprep.subr.mxu0 %v144
  %348 = vmatpush1.msra.mxu0 %v143
  %349 = vmatprep.subr.mxu0 0.0
  %350 = vmatpush1.msra.mxu0 0.0
  %351 = vmatprep.subr.mxu0 0.0
  %352 = vmatpush1.msra.mxu0 0.0
  %353 = vmatprep.subr.mxu0 0.0
  %354 = vmatpush1.msra.mxu0 0.0
  %355 = vmatprep.subr.mxu0 0.0
  %356 = vmatpush1.msra.mxu0 0.0
  %357 = vmatprep.subr.mxu0 0.0
  %358 = vmatpush1.msra.mxu0 0.0
  %359 = vmatprep.subr.mxu0 0.0
  %360 = vmatpush1.msra.mxu0 0.0
  %361 = vmatprep.subr.mxu0 0.0
  %362 = vmatpush1.msra.mxu0 0.0
  %363 = vmatprep.subr.mxu0 0.0
  %364 = vmatpush1.msra.mxu0 0.0
  %365 = vmatprep.subr.mxu0 0.0
  %366 = vmatpush1.msra.mxu0 0.0
  %367 = vmatprep.subr.mxu0 0.0
  %368 = vmatpush1.msra.mxu0 0.0
  %369 = vmatprep.subr.mxu0 0.0
  %370 = vmatpush1.msra.mxu0 0.0
  %371 = vmatprep.subr.mxu0 0.0
  %372 = vmatpush1.msra.mxu0 0.0
  %373 = vmatprep.subr.mxu0 0.0
  %374 = vmatpush1.msra.mxu0 0.0
  %375 = vmatprep.subr.mxu0 0.0
  %376 = vmatpush1.msra.mxu0 0.0
  %377 = vmatprep.subr.mxu0 0.0
  %378 = vmatpush1.msra.mxu0 0.0
  %379 = vmatprep.subr.mxu0 0.0
  %380 = vmatpush1.msra.mxu0 0.0
  %381 = vmatprep.mubr.f32.mxu0 0.0
  %382 = vmatmul.mubr.f32.gmra.mrb[0].mxu0 %v316
  %v383 = vpop.f32.mrb[0].mxu0
  %v384 = vadd.f32 0.0, %v383
  %v385 = vpop.f32.mrb[0].mxu0
  %v386 = vadd.f32 0.0, %v385
  %387 = vdwg.mxu0
  %388 = vmatprep.subr.mxu0 %v86
  %389 = vmatpush1.msra.mxu0 %v85
  %390 = vmatprep.subr.mxu0 %v90
  %391 = vmatpush1.msra.mxu0 %v89
  %392 = vmatprep.subr.mxu0 %v94
  %393 = vmatpush1.msra.mxu0 %v93
  %394 = vmatprep.subr.mxu0 %v98
  %395 = vmatpush1.msra.mxu0 %v97
  %396 = vmatprep.subr.mxu0 %v102
  %397 = vmatpush1.msra.mxu0 %v101
  %398 = vmatprep.subr.mxu0 %v106
  %399 = vmatpush1.msra.mxu0 %v105
  %400 = vmatprep.subr.mxu0 %v110
  %401 = vmatpush1.msra.mxu0 %v109
  %402 = vmatprep.subr.mxu0 %v114
  %403 = vmatpush1.msra.mxu0 %v113
  %404 = vmatprep.subr.mxu0 %v118
  %405 = vmatpush1.msra.mxu0 %v117
  %406 = vmatprep.subr.mxu0 %v122
  %407 = vmatpush1.msra.mxu0 %v121
  %408 = vmatprep.subr.mxu0 %v126
  %409 = vmatpush1.msra.mxu0 %v125
  %410 = vmatprep.subr.mxu0 %v130
  %411 = vmatpush1.msra.mxu0 %v129
  %412 = vmatprep.subr.mxu0 %v134
  %413 = vmatpush1.msra.mxu0 %v133
  %414 = vmatprep.subr.mxu0 %v138
  %415 = vmatpush1.msra.mxu0 %v137
  %416 = vmatprep.subr.mxu0 %v142
  %417 = vmatpush1.msra.mxu0 %v141
  %418 = vmatprep.subr.mxu0 %v146
  %419 = vmatpush1.msra.mxu0 %v145
  %420 = vmatprep.subr.mxu0 0.0
  %421 = vmatpush1.msra.mxu0 0.0
  %422 = vmatprep.subr.mxu0 0.0
  %423 = vmatpush1.msra.mxu0 0.0
  %424 = vmatprep.subr.mxu0 0.0
  %425 = vmatpush1.msra.mxu0 0.0
  %426 = vmatprep.subr.mxu0 0.0
  %427 = vmatpush1.msra.mxu0 0.0
  %428 = vmatprep.subr.mxu0 0.0
  %429 = vmatpush1.msra.mxu0 0.0
  %430 = vmatprep.subr.mxu0 0.0
  %431 = vmatpush1.msra.mxu0 0.0
  %432 = vmatprep.subr.mxu0 0.0
  %433 = vmatpush1.msra.mxu0 0.0
  %434 = vmatprep.subr.mxu0 0.0
  %435 = vmatpush1.msra.mxu0 0.0
  %436 = vmatprep.subr.mxu0 0.0
  %437 = vmatpush1.msra.mxu0 0.0
  %438 = vmatprep.subr.mxu0 0.0
  %439 = vmatpush1.msra.mxu0 0.0
  %440 = vmatprep.subr.mxu0 0.0
  %441 = vmatpush1.msra.mxu0 0.0
  %442 = vmatprep.subr.mxu0 0.0
  %443 = vmatpush1.msra.mxu0 0.0
  %444 = vmatprep.subr.mxu0 0.0
  %445 = vmatpush1.msra.mxu0 0.0
  %446 = vmatprep.subr.mxu0 0.0
  %447 = vmatpush1.msra.mxu0 0.0
  %448 = vmatprep.subr.mxu0 0.0
  %449 = vmatpush1.msra.mxu0 0.0
  %450 = vmatprep.subr.mxu0 0.0
  %451 = vmatpush1.msra.mxu0 0.0
  %452 = vmatprep.mubr.f32.mxu0 0.0
  %453 = vmatmul.mubr.f32.gmra.mrb[0].mxu0 %v316
  %v454 = vpop.f32.mrb[0].mxu0
  %v455 = vadd.f32 0.0, %v454
  %v456 = vpop.f32.mrb[0].mxu0
  %v457 = vadd.f32 0.0, %v456
  %458 = vdwg.mxu0
  %v463 = vrot.slane %v384, 7
  %v464 = vrot.slane %v386, 7
  %v465 = vrot.slane %v455, 7
  %v466 = vrot.slane %v457, 7
  %v471 = vadd.f32 %v79, %v463
  %v472 = vadd.f32 %v80, %v464
  %v473 = vadd.f32 %v81, %v465
  %v474 = vadd.f32 %v82, %v466
  %v475 = vxor.u32 %v471, 2147483648
  %v476 = vmul.f32 %v475, 1.442695
  %v477 = vpow.pop %v476
  %v478 = vadd.f32 %v477, 1.0
  %v479 = vrcp.pop %v478
  %v480 = vmul.f32 1.0, %v479
  %v481 = vxor.u32 %v472, 2147483648
  %v482 = vmul.f32 %v481, 1.442695
  %v483 = vpow.pop %v482
  %v484 = vadd.f32 %v483, 1.0
  %v485 = vrcp.pop %v484
  %v486 = vmul.f32 1.0, %v485
  %v487 = vtanh.pop %v473
  %v488 = vxor.u32 %v474, 2147483648
  %v489 = vmul.f32 %v488, 1.442695
  %v490 = vpow.pop %v489
  %v491 = vadd.f32 %v490, 1.0
  %v492 = vrcp.pop %v491
  %v493 = vmul.f32 1.0, %v492
  %v495 = vrot.slane %v314, 7
  %v497 = vmul.f32 %v486, %v495
  %v498 = vmul.f32 %v480, %v487
  %v499 = vadd.f32 %v497, %v498
  %v500 = vtanh.pop %v499
  %v501 = vmul.f32 %v493, %v500
  %v503 = vrot.slane %v501, 1
  %505 = vmatprep.subr.mxu0 %v84
  %506 = vmatpush1.msra.mxu0 %v83
  %507 = vmatprep.subr.mxu0 %v88
  %508 = vmatpush1.msra.mxu0 %v87
  %509 = vmatprep.subr.mxu0 %v92
  %510 = vmatpush1.msra.mxu0 %v91
  %511 = vmatprep.subr.mxu0 %v96
  %512 = vmatpush1.msra.mxu0 %v95
  %513 = vmatprep.subr.mxu0 %v100
  %514 = vmatpush1.msra.mxu0 %v99
  %515 = vmatprep.subr.mxu0 %v104
  %516 = vmatpush1.msra.mxu0 %v103
  %517 = vmatprep.subr.mxu0 %v108
  %518 = vmatpush1.msra.mxu0 %v107
  %519 = vmatprep.subr.mxu0 %v112
  %520 = vmatpush1.msra.mxu0 %v111
  %521 = vmatprep.subr.mxu0 %v116
  %522 = vmatpush1.msra.mxu0 %v115
  %523 = vmatprep.subr.mxu0 %v120
  %524 = vmatpush1.msra.mxu0 %v119
  %525 = vmatprep.subr.mxu0 %v124
  %526 = vmatpush1.msra.mxu0 %v123
  %527 = vmatprep.subr.mxu0 %v128
  %528 = vmatpush1.msra.mxu0 %v127
  %529 = vmatprep.subr.mxu0 %v132
  %530 = vmatpush1.msra.mxu0 %v131
  %531 = vmatprep.subr.mxu0 %v136
  %532 = vmatpush1.msra.mxu0 %v135
  %533 = vmatprep.subr.mxu0 %v140
  %534 = vmatpush1.msra.mxu0 %v139
  %535 = vmatprep.subr.mxu0 %v144
  %536 = vmatpush1.msra.mxu0 %v143
  %537 = vmatprep.subr.mxu0 0.0
  %538 = vmatpush1.msra.mxu0 0.0
  %539 = vmatprep.subr.mxu0 0.0
  %540 = vmatpush1.msra.mxu0 0.0
  %541 = vmatprep.subr.mxu0 0.0
  %542 = vmatpush1.msra.mxu0 0.0
  %543 = vmatprep.subr.mxu0 0.0
  %544 = vmatpush1.msra.mxu0 0.0
  %545 = vmatprep.subr.mxu0 0.0
  %546 = vmatpush1.msra.mxu0 0.0
  %547 = vmatprep.subr.mxu0 0.0
  %548 = vmatpush1.msra.mxu0 0.0
  %549 = vmatprep.subr.mxu0 0.0
  %550 = vmatpush1.msra.mxu0 0.0
  %551 = vmatprep.subr.mxu0 0.0
  %552 = vmatpush1.msra.mxu0 0.0
  %553 = vmatprep.subr.mxu0 0.0
  %554 = vmatpush1.msra.mxu0 0.0
  %555 = vmatprep.subr.mxu0 0.0
  %556 = vmatpush1.msra.mxu0 0.0
  %557 = vmatprep.subr.mxu0 0.0
  %558 = vmatpush1.msra.mxu0 0.0
  %559 = vmatprep.subr.mxu0 0.0
  %560 = vmatpush1.msra.mxu0 0.0
  %561 = vmatprep.subr.mxu0 0.0
  %562 = vmatpush1.msra.mxu0 0.0
  %563 = vmatprep.subr.mxu0 0.0
  %564 = vmatpush1.msra.mxu0 0.0
  %565 = vmatprep.subr.mxu0 0.0
  %566 = vmatpush1.msra.mxu0 0.0
  %567 = vmatprep.subr.mxu0 0.0
  %568 = vmatpush1.msra.mxu0 0.0
  %569 = vmatprep.mubr.f32.mxu0 0.0
  %570 = vmatmul.mubr.f32.gmra.mrb[0].mxu0 %v503
  %v571 = vpop.f32.mrb[0].mxu0
  %v572 = vadd.f32 0.0, %v571
  %v573 = vpop.f32.mrb[0].mxu0
  %v574 = vadd.f32 0.0, %v573
  %575 = vdwg.mxu0
  %576 = vmatprep.subr.mxu0 %v86
  %577 = vmatpush1.msra.mxu0 %v85
  %578 = vmatprep.subr.mxu0 %v90
  %579 = vmatpush1.msra.mxu0 %v89
  %580 = vmatprep.subr.mxu0 %v94
  %581 = vmatpush1.msra.mxu0 %v93
  %582 = vmatprep.subr.mxu0 %v98
  %583 = vmatpush1.msra.mxu0 %v97
  %584 = vmatprep.subr.mxu0 %v102
  %585 = vmatpush1.msra.mxu0 %v101
  %586 = vmatprep.subr.mxu0 %v106
  %587 = vmatpush1.msra.mxu0 %v105
  %588 = vmatprep.subr.mxu0 %v110
  %589 = vmatpush1.msra.mxu0 %v109
  %590 = vmatprep.subr.mxu0 %v114
  %591 = vmatpush1.msra.mxu0 %v113
  %592 = vmatprep.subr.mxu0 %v118
  %593 = vmatpush1.msra.mxu0 %v117
  %594 = vmatprep.subr.mxu0 %v122
  %595 = vmatpush1.msra.mxu0 %v121
  %596 = vmatprep.subr.mxu0 %v126
  %597 = vmatpush1.msra.mxu0 %v125
  %598 = vmatprep.subr.mxu0 %v130
  %599 = vmatpush1.msra.mxu0 %v129
  %600 = vmatprep.subr.mxu0 %v134
  %601 = vmatpush1.msra.mxu0 %v133
  %602 = vmatprep.subr.mxu0 %v138
  %603 = vmatpush1.msra.mxu0 %v137
  %604 = vmatprep.subr.mxu0 %v142
  %605 = vmatpush1.msra.mxu0 %v141
  %606 = vmatprep.subr.mxu0 %v146
  %607 = vmatpush1.msra.mxu0 %v145
  %608 = vmatprep.subr.mxu0 0.0
  %609 = vmatpush1.msra.mxu0 0.0
  %610 = vmatprep.subr.mxu0 0.0
  %611 = vmatpush1.msra.mxu0 0.0
  %612 = vmatprep.subr.mxu0 0.0
  %613 = vmatpush1.msra.mxu0 0.0
  %614 = vmatprep.subr.mxu0 0.0
  %615 = vmatpush1.msra.mxu0 0.0
  %616 = vmatprep.subr.mxu0 0.0
  %617 = vmatpush1.msra.mxu0 0.0
  %618 = vmatprep.subr.mxu0 0.0
  %619 = vmatpush1.msra.mxu0 0.0
  %620 = vmatprep.subr.mxu0 0.0
  %621 = vmatpush1.msra.mxu0 0.0
  %622 = vmatprep.subr.mxu0 0.0
  %623 = vmatpush1.msra.mxu0 0.0
  %624 = vmatprep.subr.mxu0 0.0
  %625 = vmatpush1.msra.mxu0 0.0
  %626 = vmatprep.subr.mxu0 0.0
  %627 = vmatpush1.msra.mxu0 0.0
  %628 = vmatprep.subr.mxu0 0.0
  %629 = vmatpush1.msra.mxu0 0.0
  %630 = vmatprep.subr.mxu0 0.0
  %631 = vmatpush1.msra.mxu0 0.0
  %632 = vmatprep.subr.mxu0 0.0
  %633 = vmatpush1.msra.mxu0 0.0
  %634 = vmatprep.subr.mxu0 0.0
  %635 = vmatpush1.msra.mxu0 0.0
  %636 = vmatprep.subr.mxu0 0.0
  %637 = vmatpush1.msra.mxu0 0.0
  %638 = vmatprep.subr.mxu0 0.0
  %639 = vmatpush1.msra.mxu0 0.0
  %640 = vmatprep.mubr.f32.mxu0 0.0
  %641 = vmatmul.mubr.f32.gmra.mrb[0].mxu0 %v503
  %v642 = vpop.f32.mrb[0].mxu0
  %v643 = vadd.f32 0.0, %v642
  %v644 = vpop.f32.mrb[0].mxu0
  %v645 = vadd.f32 0.0, %v644
  %646 = vdwg.mxu0
  %v651 = vrot.slane %v572, 6
  %v652 = vrot.slane %v574, 6
  %v653 = vrot.slane %v643, 6
  %v654 = vrot.slane %v645, 6
  %v659 = vadd.f32 %v79, %v651
  %v660 = vadd.f32 %v80, %v652
  %v661 = vadd.f32 %v81, %v653
  %v662 = vadd.f32 %v82, %v654
  %v663 = vxor.u32 %v659, 2147483648
  %v664 = vmul.f32 %v663, 1.442695
  %v665 = vpow.pop %v664
  %v666 = vadd.f32 %v665, 1.0
  %v667 = vrcp.pop %v666
  %v668 = vmul.f32 1.0, %v667
  %v669 = vxor.u32 %v660, 2147483648
  %v670 = vmul.f32 %v669, 1.442695
  %v671 = vpow.pop %v670
  %v672 = vadd.f32 %v671, 1.0
  %v673 = vrcp.pop %v672
  %v674 = vmul.f32 1.0, %v673
  %v675 = vtanh.pop %v661
  %v676 = vxor.u32 %v662, 2147483648
  %v677 = vmul.f32 %v676, 1.442695
  %v678 = vpow.pop %v677
  %v679 = vadd.f32 %v678, 1.0
  %v680 = vrcp.pop %v679
  %v681 = vmul.f32 1.0, %v680
  %v683 = vrot.slane %v499, 7
  %v685 = vmul.f32 %v674, %v683
  %v686 = vmul.f32 %v668, %v675
  %v687 = vadd.f32 %v685, %v686
  %v688 = vtanh.pop %v687
  %v689 = vmul.f32 %v681, %v688
  %v691 = vrot.slane %v689, 2
  %693 = vmatprep.subr.mxu0 %v84
  %694 = vmatpush1.msra.mxu0 %v83
  %695 = vmatprep.subr.mxu0 %v88
  %696 = vmatpush1.msra.mxu0 %v87
  %697 = vmatprep.subr.mxu0 %v92
  %698 = vmatpush1.msra.mxu0 %v91
  %699 = vmatprep.subr.mxu0 %v96
  %700 = vmatpush1.msra.mxu0 %v95
  %701 = vmatprep.subr.mxu0 %v100
  %702 = vmatpush1.msra.mxu0 %v99
  %703 = vmatprep.subr.mxu0 %v104
  %704 = vmatpush1.msra.mxu0 %v103
  %705 = vmatprep.subr.mxu0 %v108
  %706 = vmatpush1.msra.mxu0 %v107
  %707 = vmatprep.subr.mxu0 %v112
  %708 = vmatpush1.msra.mxu0 %v111
  %709 = vmatprep.subr.mxu0 %v116
  %710 = vmatpush1.msra.mxu0 %v115
  %711 = vmatprep.subr.mxu0 %v120
  %712 = vmatpush1.msra.mxu0 %v119
  %713 = vmatprep.subr.mxu0 %v124
  %714 = vmatpush1.msra.mxu0 %v123
  %715 = vmatprep.subr.mxu0 %v128
  %716 = vmatpush1.msra.mxu0 %v127
  %717 = vmatprep.subr.mxu0 %v132
  %718 = vmatpush1.msra.mxu0 %v131
  %719 = vmatprep.subr.mxu0 %v136
  %720 = vmatpush1.msra.mxu0 %v135
  %721 = vmatprep.subr.mxu0 %v140
  %722 = vmatpush1.msra.mxu0 %v139
  %723 = vmatprep.subr.mxu0 %v144
  %724 = vmatpush1.msra.mxu0 %v143
  %725 = vmatprep.subr.mxu0 0.0
  %726 = vmatpush1.msra.mxu0 0.0
  %727 = vmatprep.subr.mxu0 0.0
  %728 = vmatpush1.msra.mxu0 0.0
  %729 = vmatprep.subr.mxu0 0.0
  %730 = vmatpush1.msra.mxu0 0.0
  %731 = vmatprep.subr.mxu0 0.0
  %732 = vmatpush1.msra.mxu0 0.0
  %733 = vmatprep.subr.mxu0 0.0
  %734 = vmatpush1.msra.mxu0 0.0
  %735 = vmatprep.subr.mxu0 0.0
  %736 = vmatpush1.msra.mxu0 0.0
  %737 = vmatprep.subr.mxu0 0.0
  %738 = vmatpush1.msra.mxu0 0.0
  %739 = vmatprep.subr.mxu0 0.0
  %740 = vmatpush1.msra.mxu0 0.0
  %741 = vmatprep.subr.mxu0 0.0
  %742 = vmatpush1.msra.mxu0 0.0
  %743 = vmatprep.subr.mxu0 0.0
  %744 = vmatpush1.msra.mxu0 0.0
  %745 = vmatprep.subr.mxu0 0.0
  %746 = vmatpush1.msra.mxu0 0.0
  %747 = vmatprep.subr.mxu0 0.0
  %748 = vmatpush1.msra.mxu0 0.0
  %749 = vmatprep.subr.mxu0 0.0
  %750 = vmatpush1.msra.mxu0 0.0
  %751 = vmatprep.subr.mxu0 0.0
  %752 = vmatpush1.msra.mxu0 0.0
  %753 = vmatprep.subr.mxu0 0.0
  %754 = vmatpush1.msra.mxu0 0.0
  %755 = vmatprep.subr.mxu0 0.0
  %756 = vmatpush1.msra.mxu0 0.0
  %757 = vmatprep.mubr.f32.mxu0 0.0
  %758 = vmatmul.mubr.f32.gmra.mrb[0].mxu0 %v691
  %v759 = vpop.f32.mrb[0].mxu0
  %v760 = vadd.f32 0.0, %v759
  %v761 = vpop.f32.mrb[0].mxu0
  %v762 = vadd.f32 0.0, %v761
  %763 = vdwg.mxu0
  %764 = vmatprep.subr.mxu0 %v86
  %765 = vmatpush1.msra.mxu0 %v85
  %766 = vmatprep.subr.mxu0 %v90
  %767 = vmatpush1.msra.mxu0 %v89
  %768 = vmatprep.subr.mxu0 %v94
  %769 = vmatpush1.msra.mxu0 %v93
  %770 = vmatprep.subr.mxu0 %v98
  %771 = vmatpush1.msra.mxu0 %v97
  %772 = vmatprep.subr.mxu0 %v102
  %773 = vmatpush1.msra.mxu0 %v101
  %774 = vmatprep.subr.mxu0 %v106
  %775 = vmatpush1.msra.mxu0 %v105
  %776 = vmatprep.subr.mxu0 %v110
  %777 = vmatpush1.msra.mxu0 %v109
  %778 = vmatprep.subr.mxu0 %v114
  %779 = vmatpush1.msra.mxu0 %v113
  %780 = vmatprep.subr.mxu0 %v118
  %781 = vmatpush1.msra.mxu0 %v117
  %782 = vmatprep.subr.mxu0 %v122
  %783 = vmatpush1.msra.mxu0 %v121
  %784 = vmatprep.subr.mxu0 %v126
  %785 = vmatpush1.msra.mxu0 %v125
  %786 = vmatprep.subr.mxu0 %v130
  %787 = vmatpush1.msra.mxu0 %v129
  %788 = vmatprep.subr.mxu0 %v134
  %789 = vmatpush1.msra.mxu0 %v133
  %790 = vmatprep.subr.mxu0 %v138
  %791 = vmatpush1.msra.mxu0 %v137
  %792 = vmatprep.subr.mxu0 %v142
  %793 = vmatpush1.msra.mxu0 %v141
  %794 = vmatprep.subr.mxu0 %v146
  %795 = vmatpush1.msra.mxu0 %v145
  %796 = vmatprep.subr.mxu0 0.0
  %797 = vmatpush1.msra.mxu0 0.0
  %798 = vmatprep.subr.mxu0 0.0
  %799 = vmatpush1.msra.mxu0 0.0
  %800 = vmatprep.subr.mxu0 0.0
  %801 = vmatpush1.msra.mxu0 0.0
  %802 = vmatprep.subr.mxu0 0.0
  %803 = vmatpush1.msra.mxu0 0.0
  %804 = vmatprep.subr.mxu0 0.0
  %805 = vmatpush1.msra.mxu0 0.0
  %806 = vmatprep.subr.mxu0 0.0
  %807 = vmatpush1.msra.mxu0 0.0
  %808 = vmatprep.subr.mxu0 0.0
  %809 = vmatpush1.msra.mxu0 0.0
  %810 = vmatprep.subr.mxu0 0.0
  %811 = vmatpush1.msra.mxu0 0.0
  %812 = vmatprep.subr.mxu0 0.0
  %813 = vmatpush1.msra.mxu0 0.0
  %814 = vmatprep.subr.mxu0 0.0
  %815 = vmatpush1.msra.mxu0 0.0
  %816 = vmatprep.subr.mxu0 0.0
  %817 = vmatpush1.msra.mxu0 0.0
  %818 = vmatprep.subr.mxu0 0.0
  %819 = vmatpush1.msra.mxu0 0.0
  %820 = vmatprep.subr.mxu0 0.0
  %821 = vmatpush1.msra.mxu0 0.0
  %822 = vmatprep.subr.mxu0 0.0
  %823 = vmatpush1.msra.mxu0 0.0
  %824 = vmatprep.subr.mxu0 0.0
  %825 = vmatpush1.msra.mxu0 0.0
  %826 = vmatprep.subr.mxu0 0.0
  %827 = vmatpush1.msra.mxu0 0.0
  %828 = vmatprep.mubr.f32.mxu0 0.0
  %829 = vmatmul.mubr.f32.gmra.mrb[0].mxu0 %v691
  %v830 = vpop.f32.mrb[0].mxu0
  %v831 = vadd.f32 0.0, %v830
  %v832 = vpop.f32.mrb[0].mxu0
  %v833 = vadd.f32 0.0, %v832
  %834 = vdwg.mxu0
  %v839 = vrot.slane %v760, 5
  %v840 = vrot.slane %v762, 5
  %v841 = vrot.slane %v831, 5
  %v842 = vrot.slane %v833, 5
  %v847 = vadd.f32 %v79, %v839
  %v848 = vadd.f32 %v80, %v840
  %v849 = vadd.f32 %v81, %v841
  %v850 = vadd.f32 %v82, %v842
  %v851 = vxor.u32 %v847, 2147483648
  %v852 = vmul.f32 %v851, 1.442695
  %v853 = vpow.pop %v852
  %v854 = vadd.f32 %v853, 1.0
  %v855 = vrcp.pop %v854
  %v856 = vmul.f32 1.0, %v855
  %v857 = vxor.u32 %v848, 2147483648
  %v858 = vmul.f32 %v857, 1.442695
  %v859 = vpow.pop %v858
  %v860 = vadd.f32 %v859, 1.0
  %v861 = vrcp.pop %v860
  %v862 = vmul.f32 1.0, %v861
  %v863 = vtanh.pop %v849
  %v864 = vxor.u32 %v850, 2147483648
  %v865 = vmul.f32 %v864, 1.442695
  %v866 = vpow.pop %v865
  %v867 = vadd.f32 %v866, 1.0
  %v868 = vrcp.pop %v867
  %v869 = vmul.f32 1.0, %v868
  %v871 = vrot.slane %v687, 7
  %v873 = vmul.f32 %v862, %v871
  %v874 = vmul.f32 %v856, %v863
  %v875 = vadd.f32 %v873, %v874
  %v876 = vtanh.pop %v875
  %v877 = vmul.f32 %v869, %v876
  %v879 = vrot.slane %v877, 3
  %881 = vmatprep.subr.mxu0 %v84
  %882 = vmatpush1.msra.mxu0 %v83
  %883 = vmatprep.subr.mxu0 %v88
  %884 = vmatpush1.msra.mxu0 %v87
  %885 = vmatprep.subr.mxu0 %v92
  %886 = vmatpush1.msra.mxu0 %v91
  %887 = vmatprep.subr.mxu0 %v96
  %888 = vmatpush1.msra.mxu0 %v95
  %889 = vmatprep.subr.mxu0 %v100
  %890 = vmatpush1.msra.mxu0 %v99
  %891 = vmatprep.subr.mxu0 %v104
  %892 = vmatpush1.msra.mxu0 %v103
  %893 = vmatprep.subr.mxu0 %v108
  %894 = vmatpush1.msra.mxu0 %v107
  %895 = vmatprep.subr.mxu0 %v112
  %896 = vmatpush1.msra.mxu0 %v111
  %897 = vmatprep.subr.mxu0 %v116
  %898 = vmatpush1.msra.mxu0 %v115
  %899 = vmatprep.subr.mxu0 %v120
  %900 = vmatpush1.msra.mxu0 %v119
  %901 = vmatprep.subr.mxu0 %v124
  %902 = vmatpush1.msra.mxu0 %v123
  %903 = vmatprep.subr.mxu0 %v128
  %904 = vmatpush1.msra.mxu0 %v127
  %905 = vmatprep.subr.mxu0 %v132
  %906 = vmatpush1.msra.mxu0 %v131
  %907 = vmatprep.subr.mxu0 %v136
  %908 = vmatpush1.msra.mxu0 %v135
  %909 = vmatprep.subr.mxu0 %v140
  %910 = vmatpush1.msra.mxu0 %v139
  %911 = vmatprep.subr.mxu0 %v144
  %912 = vmatpush1.msra.mxu0 %v143
  %913 = vmatprep.subr.mxu0 0.0
  %914 = vmatpush1.msra.mxu0 0.0
  %915 = vmatprep.subr.mxu0 0.0
  %916 = vmatpush1.msra.mxu0 0.0
  %917 = vmatprep.subr.mxu0 0.0
  %918 = vmatpush1.msra.mxu0 0.0
  %919 = vmatprep.subr.mxu0 0.0
  %920 = vmatpush1.msra.mxu0 0.0
  %921 = vmatprep.subr.mxu0 0.0
  %922 = vmatpush1.msra.mxu0 0.0
  %923 = vmatprep.subr.mxu0 0.0
  %924 = vmatpush1.msra.mxu0 0.0
  %925 = vmatprep.subr.mxu0 0.0
  %926 = vmatpush1.msra.mxu0 0.0
  %927 = vmatprep.subr.mxu0 0.0
  %928 = vmatpush1.msra.mxu0 0.0
  %929 = vmatprep.subr.mxu0 0.0
  %930 = vmatpush1.msra.mxu0 0.0
  %931 = vmatprep.subr.mxu0 0.0
  %932 = vmatpush1.msra.mxu0 0.0
  %933 = vmatprep.subr.mxu0 0.0
  %934 = vmatpush1.msra.mxu0 0.0
  %935 = vmatprep.subr.mxu0 0.0
  %936 = vmatpush1.msra.mxu0 0.0
  %937 = vmatprep.subr.mxu0 0.0
  %938 = vmatpush1.msra.mxu0 0.0
  %939 = vmatprep.subr.mxu0 0.0
  %940 = vmatpush1.msra.mxu0 0.0
  %941 = vmatprep.subr.mxu0 0.0
  %942 = vmatpush1.msra.mxu0 0.0
  %943 = vmatprep.subr.mxu0 0.0
  %944 = vmatpush1.msra.mxu0 0.0
  %945 = vmatprep.mubr.f32.mxu0 0.0
  %946 = vmatmul.mubr.f32.gmra.mrb[0].mxu0 %v879
  %v947 = vpop.f32.mrb[0].mxu0
  %v948 = vadd.f32 0.0, %v947
  %v949 = vpop.f32.mrb[0].mxu0
  %v950 = vadd.f32 0.0, %v949
  %951 = vdwg.mxu0
  %952 = vmatprep.subr.mxu0 %v86
  %953 = vmatpush1.msra.mxu0 %v85
  %954 = vmatprep.subr.mxu0 %v90
  %955 = vmatpush1.msra.mxu0 %v89
  %956 = vmatprep.subr.mxu0 %v94
  %957 = vmatpush1.msra.mxu0 %v93
  %958 = vmatprep.subr.mxu0 %v98
  %959 = vmatpush1.msra.mxu0 %v97
  %960 = vmatprep.subr.mxu0 %v102
  %961 = vmatpush1.msra.mxu0 %v101
  %962 = vmatprep.subr.mxu0 %v106
  %963 = vmatpush1.msra.mxu0 %v105
  %964 = vmatprep.subr.mxu0 %v110
  %965 = vmatpush1.msra.mxu0 %v109
  %966 = vmatprep.subr.mxu0 %v114
  %967 = vmatpush1.msra.mxu0 %v113
  %968 = vmatprep.subr.mxu0 %v118
  %969 = vmatpush1.msra.mxu0 %v117
  %970 = vmatprep.subr.mxu0 %v122
  %971 = vmatpush1.msra.mxu0 %v121
  %972 = vmatprep.subr.mxu0 %v126
  %973 = vmatpush1.msra.mxu0 %v125
  %974 = vmatprep.subr.mxu0 %v130
  %975 = vmatpush1.msra.mxu0 %v129
  %976 = vmatprep.subr.mxu0 %v134
  %977 = vmatpush1.msra.mxu0 %v133
  %978 = vmatprep.subr.mxu0 %v138
  %979 = vmatpush1.msra.mxu0 %v137
  %980 = vmatprep.subr.mxu0 %v142
  %981 = vmatpush1.msra.mxu0 %v141
  %982 = vmatprep.subr.mxu0 %v146
  %983 = vmatpush1.msra.mxu0 %v145
  %984 = vmatprep.subr.mxu0 0.0
  %985 = vmatpush1.msra.mxu0 0.0
  %986 = vmatprep.subr.mxu0 0.0
  %987 = vmatpush1.msra.mxu0 0.0
  %988 = vmatprep.subr.mxu0 0.0
  %989 = vmatpush1.msra.mxu0 0.0
  %990 = vmatprep.subr.mxu0 0.0
  %991 = vmatpush1.msra.mxu0 0.0
  %992 = vmatprep.subr.mxu0 0.0
  %993 = vmatpush1.msra.mxu0 0.0
  %994 = vmatprep.subr.mxu0 0.0
  %995 = vmatpush1.msra.mxu0 0.0
  %996 = vmatprep.subr.mxu0 0.0
  %997 = vmatpush1.msra.mxu0 0.0
  %998 = vmatprep.subr.mxu0 0.0
  %999 = vmatpush1.msra.mxu0 0.0
  %1000 = vmatprep.subr.mxu0 0.0
  %1001 = vmatpush1.msra.mxu0 0.0
  %1002 = vmatprep.subr.mxu0 0.0
  %1003 = vmatpush1.msra.mxu0 0.0
  %1004 = vmatprep.subr.mxu0 0.0
  %1005 = vmatpush1.msra.mxu0 0.0
  %1006 = vmatprep.subr.mxu0 0.0
  %1007 = vmatpush1.msra.mxu0 0.0
  %1008 = vmatprep.subr.mxu0 0.0
  %1009 = vmatpush1.msra.mxu0 0.0
  %1010 = vmatprep.subr.mxu0 0.0
  %1011 = vmatpush1.msra.mxu0 0.0
  %1012 = vmatprep.subr.mxu0 0.0
  %1013 = vmatpush1.msra.mxu0 0.0
  %1014 = vmatprep.subr.mxu0 0.0
  %1015 = vmatpush1.msra.mxu0 0.0
  %1016 = vmatprep.mubr.f32.mxu0 0.0
  %1017 = vmatmul.mubr.f32.gmra.mrb[0].mxu0 %v879
  %v1018 = vpop.f32.mrb[0].mxu0
  %v1019 = vadd.f32 0.0, %v1018
  %v1020 = vpop.f32.mrb[0].mxu0
  %v1021 = vadd.f32 0.0, %v1020
  %1022 = vdwg.mxu0
  %v1027 = vrot.slane %v948, 4
  %v1028 = vrot.slane %v950, 4
  %v1029 = vrot.slane %v1019, 4
  %v1030 = vrot.slane %v1021, 4
  %v1035 = vadd.f32 %v79, %v1027
  %v1036 = vadd.f32 %v80, %v1028
  %v1037 = vadd.f32 %v81, %v1029
  %v1038 = vadd.f32 %v82, %v1030
  %v1039 = vxor.u32 %v1035, 2147483648
  %v1040 = vmul.f32 %v1039, 1.442695
  %v1041 = vpow.pop %v1040
  %v1042 = vadd.f32 %v1041, 1.0
  %v1043 = vrcp.pop %v1042
  %v1044 = vmul.f32 1.0, %v1043
  %v1045 = vxor.u32 %v1036, 2147483648
  %v1046 = vmul.f32 %v1045, 1.442695
  %v1047 = vpow.pop %v1046
  %v1048 = vadd.f32 %v1047, 1.0
  %v1049 = vrcp.pop %v1048
  %v1050 = vmul.f32 1.0, %v1049
  %v1051 = vtanh.pop %v1037
  %v1052 = vxor.u32 %v1038, 2147483648
  %v1053 = vmul.f32 %v1052, 1.442695
  %v1054 = vpow.pop %v1053
  %v1055 = vadd.f32 %v1054, 1.0
  %v1056 = vrcp.pop %v1055
  %v1057 = vmul.f32 1.0, %v1056
  %v1059 = vrot.slane %v875, 7
  %v1061 = vmul.f32 %v1050, %v1059
  %v1062 = vmul.f32 %v1044, %v1051
  %v1063 = vadd.f32 %v1061, %v1062
  %v1064 = vtanh.pop %v1063
  %v1065 = vmul.f32 %v1057, %v1064
  %v1067 = vrot.slane %v1065, 4
  %1069 = vmatprep.subr.mxu0 %v84
  %1070 = vmatpush1.msra.mxu0 %v83
  %1071 = vmatprep.subr.mxu0 %v88
  %1072 = vmatpush1.msra.mxu0 %v87
  %1073 = vmatprep.subr.mxu0 %v92
  %1074 = vmatpush1.msra.mxu0 %v91
  %1075 = vmatprep.subr.mxu0 %v96
  %1076 = vmatpush1.msra.mxu0 %v95
  %1077 = vmatprep.subr.mxu0 %v100
  %1078 = vmatpush1.msra.mxu0 %v99
  %1079 = vmatprep.subr.mxu0 %v104
  %1080 = vmatpush1.msra.mxu0 %v103
  %1081 = vmatprep.subr.mxu0 %v108
  %1082 = vmatpush1.msra.mxu0 %v107
  %1083 = vmatprep.subr.mxu0 %v112
  %1084 = vmatpush1.msra.mxu0 %v111
  %1085 = vmatprep.subr.mxu0 %v116
  %1086 = vmatpush1.msra.mxu0 %v115
  %1087 = vmatprep.subr.mxu0 %v120
  %1088 = vmatpush1.msra.mxu0 %v119
  %1089 = vmatprep.subr.mxu0 %v124
  %1090 = vmatpush1.msra.mxu0 %v123
  %1091 = vmatprep.subr.mxu0 %v128
  %1092 = vmatpush1.msra.mxu0 %v127
  %1093 = vmatprep.subr.mxu0 %v132
  %1094 = vmatpush1.msra.mxu0 %v131
  %1095 = vmatprep.subr.mxu0 %v136
  %1096 = vmatpush1.msra.mxu0 %v135
  %1097 = vmatprep.subr.mxu0 %v140
  %1098 = vmatpush1.msra.mxu0 %v139
  %1099 = vmatprep.subr.mxu0 %v144
  %1100 = vmatpush1.msra.mxu0 %v143
  %1101 = vmatprep.subr.mxu0 0.0
  %1102 = vmatpush1.msra.mxu0 0.0
  %1103 = vmatprep.subr.mxu0 0.0
  %1104 = vmatpush1.msra.mxu0 0.0
  %1105 = vmatprep.subr.mxu0 0.0
  %1106 = vmatpush1.msra.mxu0 0.0
  %1107 = vmatprep.subr.mxu0 0.0
  %1108 = vmatpush1.msra.mxu0 0.0
  %1109 = vmatprep.subr.mxu0 0.0
  %1110 = vmatpush1.msra.mxu0 0.0
  %1111 = vmatprep.subr.mxu0 0.0
  %1112 = vmatpush1.msra.mxu0 0.0
  %1113 = vmatprep.subr.mxu0 0.0
  %1114 = vmatpush1.msra.mxu0 0.0
  %1115 = vmatprep.subr.mxu0 0.0
  %1116 = vmatpush1.msra.mxu0 0.0
  %1117 = vmatprep.subr.mxu0 0.0
  %1118 = vmatpush1.msra.mxu0 0.0
  %1119 = vmatprep.subr.mxu0 0.0
  %1120 = vmatpush1.msra.mxu0 0.0
  %1121 = vmatprep.subr.mxu0 0.0
  %1122 = vmatpush1.msra.mxu0 0.0
  %1123 = vmatprep.subr.mxu0 0.0
  %1124 = vmatpush1.msra.mxu0 0.0
  %1125 = vmatprep.subr.mxu0 0.0
  %1126 = vmatpush1.msra.mxu0 0.0
  %1127 = vmatprep.subr.mxu0 0.0
  %1128 = vmatpush1.msra.mxu0 0.0
  %1129 = vmatprep.subr.mxu0 0.0
  %1130 = vmatpush1.msra.mxu0 0.0
  %1131 = vmatprep.subr.mxu0 0.0
  %1132 = vmatpush1.msra.mxu0 0.0
  %1133 = vmatprep.mubr.f32.mxu0 0.0
  %1134 = vmatmul.mubr.f32.gmra.mrb[0].mxu0 %v1067
  %v1135 = vpop.f32.mrb[0].mxu0
  %v1136 = vadd.f32 0.0, %v1135
  %v1137 = vpop.f32.mrb[0].mxu0
  %v1138 = vadd.f32 0.0, %v1137
  %1139 = vdwg.mxu0
  %1140 = vmatprep.subr.mxu0 %v86
  %1141 = vmatpush1.msra.mxu0 %v85
  %1142 = vmatprep.subr.mxu0 %v90
  %1143 = vmatpush1.msra.mxu0 %v89
  %1144 = vmatprep.subr.mxu0 %v94
  %1145 = vmatpush1.msra.mxu0 %v93
  %1146 = vmatprep.subr.mxu0 %v98
  %1147 = vmatpush1.msra.mxu0 %v97
  %1148 = vmatprep.subr.mxu0 %v102
  %1149 = vmatpush1.msra.mxu0 %v101
  %1150 = vmatprep.subr.mxu0 %v106
  %1151 = vmatpush1.msra.mxu0 %v105
  %1152 = vmatprep.subr.mxu0 %v110
  %1153 = vmatpush1.msra.mxu0 %v109
  %1154 = vmatprep.subr.mxu0 %v114
  %1155 = vmatpush1.msra.mxu0 %v113
  %1156 = vmatprep.subr.mxu0 %v118
  %1157 = vmatpush1.msra.mxu0 %v117
  %1158 = vmatprep.subr.mxu0 %v122
  %1159 = vmatpush1.msra.mxu0 %v121
  %1160 = vmatprep.subr.mxu0 %v126
  %1161 = vmatpush1.msra.mxu0 %v125
  %1162 = vmatprep.subr.mxu0 %v130
  %1163 = vmatpush1.msra.mxu0 %v129
  %1164 = vmatprep.subr.mxu0 %v134
  %1165 = vmatpush1.msra.mxu0 %v133
  %1166 = vmatprep.subr.mxu0 %v138
  %1167 = vmatpush1.msra.mxu0 %v137
  %1168 = vmatprep.subr.mxu0 %v142
  %1169 = vmatpush1.msra.mxu0 %v141
  %1170 = vmatprep.subr.mxu0 %v146
  %1171 = vmatpush1.msra.mxu0 %v145
  %1172 = vmatprep.subr.mxu0 0.0
  %1173 = vmatpush1.msra.mxu0 0.0
  %1174 = vmatprep.subr.mxu0 0.0
  %1175 = vmatpush1.msra.mxu0 0.0
  %1176 = vmatprep.subr.mxu0 0.0
  %1177 = vmatpush1.msra.mxu0 0.0
  %1178 = vmatprep.subr.mxu0 0.0
  %1179 = vmatpush1.msra.mxu0 0.0
  %1180 = vmatprep.subr.mxu0 0.0
  %1181 = vmatpush1.msra.mxu0 0.0
  %1182 = vmatprep.subr.mxu0 0.0
  %1183 = vmatpush1.msra.mxu0 0.0
  %1184 = vmatprep.subr.mxu0 0.0
  %1185 = vmatpush1.msra.mxu0 0.0
  %1186 = vmatprep.subr.mxu0 0.0
  %1187 = vmatpush1.msra.mxu0 0.0
  %1188 = vmatprep.subr.mxu0 0.0
  %1189 = vmatpush1.msra.mxu0 0.0
  %1190 = vmatprep.subr.mxu0 0.0
  %1191 = vmatpush1.msra.mxu0 0.0
  %1192 = vmatprep.subr.mxu0 0.0
  %1193 = vmatpush1.msra.mxu0 0.0
  %1194 = vmatprep.subr.mxu0 0.0
  %1195 = vmatpush1.msra.mxu0 0.0
  %1196 = vmatprep.subr.mxu0 0.0
  %1197 = vmatpush1.msra.mxu0 0.0
  %1198 = vmatprep.subr.mxu0 0.0
  %1199 = vmatpush1.msra.mxu0 0.0
  %1200 = vmatprep.subr.mxu0 0.0
  %1201 = vmatpush1.msra.mxu0 0.0
  %1202 = vmatprep.subr.mxu0 0.0
  %1203 = vmatpush1.msra.mxu0 0.0
  %1204 = vmatprep.mubr.f32.mxu0 0.0
  %1205 = vmatmul.mubr.f32.gmra.mrb[0].mxu0 %v1067
  %v1206 = vpop.f32.mrb[0].mxu0
  %v1207 = vadd.f32 0.0, %v1206
  %v1208 = vpop.f32.mrb[0].mxu0
  %v1209 = vadd.f32 0.0, %v1208
  %1210 = vdwg.mxu0
  %v1215 = vrot.slane %v1136, 3
  %v1216 = vrot.slane %v1138, 3
  %v1217 = vrot.slane %v1207, 3
  %v1218 = vrot.slane %v1209, 3
  %v1223 = vadd.f32 %v79, %v1215
  %v1224 = vadd.f32 %v80, %v1216
  %v1225 = vadd.f32 %v81, %v1217
  %v1226 = vadd.f32 %v82, %v1218
  %v1227 = vxor.u32 %v1223, 2147483648
  %v1228 = vmul.f32 %v1227, 1.442695
  %v1229 = vpow.pop %v1228
  %v1230 = vadd.f32 %v1229, 1.0
  %v1231 = vrcp.pop %v1230
  %v1232 = vmul.f32 1.0, %v1231
  %v1233 = vxor.u32 %v1224, 2147483648
  %v1234 = vmul.f32 %v1233, 1.442695
  %v1235 = vpow.pop %v1234
  %v1236 = vadd.f32 %v1235, 1.0
  %v1237 = vrcp.pop %v1236
  %v1238 = vmul.f32 1.0, %v1237
  %v1239 = vtanh.pop %v1225
  %v1240 = vxor.u32 %v1226, 2147483648
  %v1241 = vmul.f32 %v1240, 1.442695
  %v1242 = vpow.pop %v1241
  %v1243 = vadd.f32 %v1242, 1.0
  %v1244 = vrcp.pop %v1243
  %v1245 = vmul.f32 1.0, %v1244
  %v1247 = vrot.slane %v1063, 7
  %v1249 = vmul.f32 %v1238, %v1247
  %v1250 = vmul.f32 %v1232, %v1239
  %v1251 = vadd.f32 %v1249, %v1250
  %v1252 = vtanh.pop %v1251
  %v1253 = vmul.f32 %v1245, %v1252
  %v1255 = vrot.slane %v1253, 5
  %1257 = vmatprep.subr.mxu0 %v84
  %1258 = vmatpush1.msra.mxu0 %v83
  %1259 = vmatprep.subr.mxu0 %v88
  %1260 = vmatpush1.msra.mxu0 %v87
  %1261 = vmatprep.subr.mxu0 %v92
  %1262 = vmatpush1.msra.mxu0 %v91
  %1263 = vmatprep.subr.mxu0 %v96
  %1264 = vmatpush1.msra.mxu0 %v95
  %1265 = vmatprep.subr.mxu0 %v100
  %1266 = vmatpush1.msra.mxu0 %v99
  %1267 = vmatprep.subr.mxu0 %v104
  %1268 = vmatpush1.msra.mxu0 %v103
  %1269 = vmatprep.subr.mxu0 %v108
  %1270 = vmatpush1.msra.mxu0 %v107
  %1271 = vmatprep.subr.mxu0 %v112
  %1272 = vmatpush1.msra.mxu0 %v111
  %1273 = vmatprep.subr.mxu0 %v116
  %1274 = vmatpush1.msra.mxu0 %v115
  %1275 = vmatprep.subr.mxu0 %v120
  %1276 = vmatpush1.msra.mxu0 %v119
  %1277 = vmatprep.subr.mxu0 %v124
  %1278 = vmatpush1.msra.mxu0 %v123
  %1279 = vmatprep.subr.mxu0 %v128
  %1280 = vmatpush1.msra.mxu0 %v127
  %1281 = vmatprep.subr.mxu0 %v132
  %1282 = vmatpush1.msra.mxu0 %v131
  %1283 = vmatprep.subr.mxu0 %v136
  %1284 = vmatpush1.msra.mxu0 %v135
  %1285 = vmatprep.subr.mxu0 %v140
  %1286 = vmatpush1.msra.mxu0 %v139
  %1287 = vmatprep.subr.mxu0 %v144
  %1288 = vmatpush1.msra.mxu0 %v143
  %1289 = vmatprep.subr.mxu0 0.0
  %1290 = vmatpush1.msra.mxu0 0.0
  %1291 = vmatprep.subr.mxu0 0.0
  %1292 = vmatpush1.msra.mxu0 0.0
  %1293 = vmatprep.subr.mxu0 0.0
  %1294 = vmatpush1.msra.mxu0 0.0
  %1295 = vmatprep.subr.mxu0 0.0
  %1296 = vmatpush1.msra.mxu0 0.0
  %1297 = vmatprep.subr.mxu0 0.0
  %1298 = vmatpush1.msra.mxu0 0.0
  %1299 = vmatprep.subr.mxu0 0.0
  %1300 = vmatpush1.msra.mxu0 0.0
  %1301 = vmatprep.subr.mxu0 0.0
  %1302 = vmatpush1.msra.mxu0 0.0
  %1303 = vmatprep.subr.mxu0 0.0
  %1304 = vmatpush1.msra.mxu0 0.0
  %1305 = vmatprep.subr.mxu0 0.0
  %1306 = vmatpush1.msra.mxu0 0.0
  %1307 = vmatprep.subr.mxu0 0.0
  %1308 = vmatpush1.msra.mxu0 0.0
  %1309 = vmatprep.subr.mxu0 0.0
  %1310 = vmatpush1.msra.mxu0 0.0
  %1311 = vmatprep.subr.mxu0 0.0
  %1312 = vmatpush1.msra.mxu0 0.0
  %1313 = vmatprep.subr.mxu0 0.0
  %1314 = vmatpush1.msra.mxu0 0.0
  %1315 = vmatprep.subr.mxu0 0.0
  %1316 = vmatpush1.msra.mxu0 0.0
  %1317 = vmatprep.subr.mxu0 0.0
  %1318 = vmatpush1.msra.mxu0 0.0
  %1319 = vmatprep.subr.mxu0 0.0
  %1320 = vmatpush1.msra.mxu0 0.0
  %1321 = vmatprep.mubr.f32.mxu0 0.0
  %1322 = vmatmul.mubr.f32.gmra.mrb[0].mxu0 %v1255
  %v1323 = vpop.f32.mrb[0].mxu0
  %v1324 = vadd.f32 0.0, %v1323
  %v1325 = vpop.f32.mrb[0].mxu0
  %v1326 = vadd.f32 0.0, %v1325
  %1327 = vdwg.mxu0
  %1328 = vmatprep.subr.mxu0 %v86
  %1329 = vmatpush1.msra.mxu0 %v85
  %1330 = vmatprep.subr.mxu0 %v90
  %1331 = vmatpush1.msra.mxu0 %v89
  %1332 = vmatprep.subr.mxu0 %v94
  %1333 = vmatpush1.msra.mxu0 %v93
  %1334 = vmatprep.subr.mxu0 %v98
  %1335 = vmatpush1.msra.mxu0 %v97
  %1336 = vmatprep.subr.mxu0 %v102
  %1337 = vmatpush1.msra.mxu0 %v101
  %1338 = vmatprep.subr.mxu0 %v106
  %1339 = vmatpush1.msra.mxu0 %v105
  %1340 = vmatprep.subr.mxu0 %v110
  %1341 = vmatpush1.msra.mxu0 %v109
  %1342 = vmatprep.subr.mxu0 %v114
  %1343 = vmatpush1.msra.mxu0 %v113
  %1344 = vmatprep.subr.mxu0 %v118
  %1345 = vmatpush1.msra.mxu0 %v117
  %1346 = vmatprep.subr.mxu0 %v122
  %1347 = vmatpush1.msra.mxu0 %v121
  %1348 = vmatprep.subr.mxu0 %v126
  %1349 = vmatpush1.msra.mxu0 %v125
  %1350 = vmatprep.subr.mxu0 %v130
  %1351 = vmatpush1.msra.mxu0 %v129
  %1352 = vmatprep.subr.mxu0 %v134
  %1353 = vmatpush1.msra.mxu0 %v133
  %1354 = vmatprep.subr.mxu0 %v138
  %1355 = vmatpush1.msra.mxu0 %v137
  %1356 = vmatprep.subr.mxu0 %v142
  %1357 = vmatpush1.msra.mxu0 %v141
  %1358 = vmatprep.subr.mxu0 %v146
  %1359 = vmatpush1.msra.mxu0 %v145
  %1360 = vmatprep.subr.mxu0 0.0
  %1361 = vmatpush1.msra.mxu0 0.0
  %1362 = vmatprep.subr.mxu0 0.0
  %1363 = vmatpush1.msra.mxu0 0.0
  %1364 = vmatprep.subr.mxu0 0.0
  %1365 = vmatpush1.msra.mxu0 0.0
  %1366 = vmatprep.subr.mxu0 0.0
  %1367 = vmatpush1.msra.mxu0 0.0
  %1368 = vmatprep.subr.mxu0 0.0
  %1369 = vmatpush1.msra.mxu0 0.0
  %1370 = vmatprep.subr.mxu0 0.0
  %1371 = vmatpush1.msra.mxu0 0.0
  %1372 = vmatprep.subr.mxu0 0.0
  %1373 = vmatpush1.msra.mxu0 0.0
  %1374 = vmatprep.subr.mxu0 0.0
  %1375 = vmatpush1.msra.mxu0 0.0
  %1376 = vmatprep.subr.mxu0 0.0
  %1377 = vmatpush1.msra.mxu0 0.0
  %1378 = vmatprep.subr.mxu0 0.0
  %1379 = vmatpush1.msra.mxu0 0.0
  %1380 = vmatprep.subr.mxu0 0.0
  %1381 = vmatpush1.msra.mxu0 0.0
  %1382 = vmatprep.subr.mxu0 0.0
  %1383 = vmatpush1.msra.mxu0 0.0
  %1384 = vmatprep.subr.mxu0 0.0
  %1385 = vmatpush1.msra.mxu0 0.0
  %1386 = vmatprep.subr.mxu0 0.0
  %1387 = vmatpush1.msra.mxu0 0.0
  %1388 = vmatprep.subr.mxu0 0.0
  %1389 = vmatpush1.msra.mxu0 0.0
  %1390 = vmatprep.subr.mxu0 0.0
  %1391 = vmatpush1.msra.mxu0 0.0
  %1392 = vmatprep.mubr.f32.mxu0 0.0
  %1393 = vmatmul.mubr.f32.gmra.mrb[0].mxu0 %v1255
  %v1394 = vpop.f32.mrb[0].mxu0
  %v1395 = vadd.f32 0.0, %v1394
  %v1396 = vpop.f32.mrb[0].mxu0
  %v1397 = vadd.f32 0.0, %v1396
  %1398 = vdwg.mxu0
  %v1403 = vrot.slane %v1324, 2
  %v1404 = vrot.slane %v1326, 2
  %v1405 = vrot.slane %v1395, 2
  %v1406 = vrot.slane %v1397, 2
  %v1411 = vadd.f32 %v79, %v1403
  %v1412 = vadd.f32 %v80, %v1404
  %v1413 = vadd.f32 %v81, %v1405
  %v1414 = vadd.f32 %v82, %v1406
  %v1415 = vxor.u32 %v1411, 2147483648
  %v1416 = vmul.f32 %v1415, 1.442695
  %v1417 = vpow.pop %v1416
  %v1418 = vadd.f32 %v1417, 1.0
  %v1419 = vrcp.pop %v1418
  %v1420 = vmul.f32 1.0, %v1419
  %v1421 = vxor.u32 %v1412, 2147483648
  %v1422 = vmul.f32 %v1421, 1.442695
  %v1423 = vpow.pop %v1422
  %v1424 = vadd.f32 %v1423, 1.0
  %v1425 = vrcp.pop %v1424
  %v1426 = vmul.f32 1.0, %v1425
  %v1427 = vtanh.pop %v1413
  %v1428 = vxor.u32 %v1414, 2147483648
  %v1429 = vmul.f32 %v1428, 1.442695
  %v1430 = vpow.pop %v1429
  %v1431 = vadd.f32 %v1430, 1.0
  %v1432 = vrcp.pop %v1431
  %v1433 = vmul.f32 1.0, %v1432
  %v1435 = vrot.slane %v1251, 7
  %v1437 = vmul.f32 %v1426, %v1435
  %v1438 = vmul.f32 %v1420, %v1427
  %v1439 = vadd.f32 %v1437, %v1438
  %v1440 = vtanh.pop %v1439
  %v1441 = vmul.f32 %v1433, %v1440
  %v1443 = vrot.slane %v1441, 6
  %1445 = vmatprep.subr.mxu0 %v84
  %1446 = vmatpush1.msra.mxu0 %v83
  %1447 = vmatprep.subr.mxu0 %v88
  %1448 = vmatpush1.msra.mxu0 %v87
  %1449 = vmatprep.subr.mxu0 %v92
  %1450 = vmatpush1.msra.mxu0 %v91
  %1451 = vmatprep.subr.mxu0 %v96
  %1452 = vmatpush1.msra.mxu0 %v95
  %1453 = vmatprep.subr.mxu0 %v100
  %1454 = vmatpush1.msra.mxu0 %v99
  %1455 = vmatprep.subr.mxu0 %v104
  %1456 = vmatpush1.msra.mxu0 %v103
  %1457 = vmatprep.subr.mxu0 %v108
  %1458 = vmatpush1.msra.mxu0 %v107
  %1459 = vmatprep.subr.mxu0 %v112
  %1460 = vmatpush1.msra.mxu0 %v111
  %1461 = vmatprep.subr.mxu0 %v116
  %1462 = vmatpush1.msra.mxu0 %v115
  %1463 = vmatprep.subr.mxu0 %v120
  %1464 = vmatpush1.msra.mxu0 %v119
  %1465 = vmatprep.subr.mxu0 %v124
  %1466 = vmatpush1.msra.mxu0 %v123
  %1467 = vmatprep.subr.mxu0 %v128
  %1468 = vmatpush1.msra.mxu0 %v127
  %1469 = vmatprep.subr.mxu0 %v132
  %1470 = vmatpush1.msra.mxu0 %v131
  %1471 = vmatprep.subr.mxu0 %v136
  %1472 = vmatpush1.msra.mxu0 %v135
  %1473 = vmatprep.subr.mxu0 %v140
  %1474 = vmatpush1.msra.mxu0 %v139
  %1475 = vmatprep.subr.mxu0 %v144
  %1476 = vmatpush1.msra.mxu0 %v143
  %1477 = vmatprep.subr.mxu0 0.0
  %1478 = vmatpush1.msra.mxu0 0.0
  %1479 = vmatprep.subr.mxu0 0.0
  %1480 = vmatpush1.msra.mxu0 0.0
  %1481 = vmatprep.subr.mxu0 0.0
  %1482 = vmatpush1.msra.mxu0 0.0
  %1483 = vmatprep.subr.mxu0 0.0
  %1484 = vmatpush1.msra.mxu0 0.0
  %1485 = vmatprep.subr.mxu0 0.0
  %1486 = vmatpush1.msra.mxu0 0.0
  %1487 = vmatprep.subr.mxu0 0.0
  %1488 = vmatpush1.msra.mxu0 0.0
  %1489 = vmatprep.subr.mxu0 0.0
  %1490 = vmatpush1.msra.mxu0 0.0
  %1491 = vmatprep.subr.mxu0 0.0
  %1492 = vmatpush1.msra.mxu0 0.0
  %1493 = vmatprep.subr.mxu0 0.0
  %1494 = vmatpush1.msra.mxu0 0.0
  %1495 = vmatprep.subr.mxu0 0.0
  %1496 = vmatpush1.msra.mxu0 0.0
  %1497 = vmatprep.subr.mxu0 0.0
  %1498 = vmatpush1.msra.mxu0 0.0
  %1499 = vmatprep.subr.mxu0 0.0
  %1500 = vmatpush1.msra.mxu0 0.0
  %1501 = vmatprep.subr.mxu0 0.0
  %1502 = vmatpush1.msra.mxu0 0.0
  %1503 = vmatprep.subr.mxu0 0.0
  %1504 = vmatpush1.msra.mxu0 0.0
  %1505 = vmatprep.subr.mxu0 0.0
  %1506 = vmatpush1.msra.mxu0 0.0
  %1507 = vmatprep.subr.mxu0 0.0
  %1508 = vmatpush1.msra.mxu0 0.0
  %1509 = vmatprep.mubr.f32.mxu0 0.0
  %1510 = vmatmul.mubr.f32.gmra.mrb[0].mxu0 %v1443
  %v1511 = vpop.f32.mrb[0].mxu0
  %v1512 = vadd.f32 0.0, %v1511
  %v1513 = vpop.f32.mrb[0].mxu0
  %v1514 = vadd.f32 0.0, %v1513
  %1515 = vdwg.mxu0
  %1516 = vmatprep.subr.mxu0 %v86
  %1517 = vmatpush1.msra.mxu0 %v85
  %1518 = vmatprep.subr.mxu0 %v90
  %1519 = vmatpush1.msra.mxu0 %v89
  %1520 = vmatprep.subr.mxu0 %v94
  %1521 = vmatpush1.msra.mxu0 %v93
  %1522 = vmatprep.subr.mxu0 %v98
  %1523 = vmatpush1.msra.mxu0 %v97
  %1524 = vmatprep.subr.mxu0 %v102
  %1525 = vmatpush1.msra.mxu0 %v101
  %1526 = vmatprep.subr.mxu0 %v106
  %1527 = vmatpush1.msra.mxu0 %v105
  %1528 = vmatprep.subr.mxu0 %v110
  %1529 = vmatpush1.msra.mxu0 %v109
  %1530 = vmatprep.subr.mxu0 %v114
  %1531 = vmatpush1.msra.mxu0 %v113
  %1532 = vmatprep.subr.mxu0 %v118
  %1533 = vmatpush1.msra.mxu0 %v117
  %1534 = vmatprep.subr.mxu0 %v122
  %1535 = vmatpush1.msra.mxu0 %v121
  %1536 = vmatprep.subr.mxu0 %v126
  %1537 = vmatpush1.msra.mxu0 %v125
  %1538 = vmatprep.subr.mxu0 %v130
  %1539 = vmatpush1.msra.mxu0 %v129
  %1540 = vmatprep.subr.mxu0 %v134
  %1541 = vmatpush1.msra.mxu0 %v133
  %1542 = vmatprep.subr.mxu0 %v138
  %1543 = vmatpush1.msra.mxu0 %v137
  %1544 = vmatprep.subr.mxu0 %v142
  %1545 = vmatpush1.msra.mxu0 %v141
  %1546 = vmatprep.subr.mxu0 %v146
  %1547 = vmatpush1.msra.mxu0 %v145
  %1548 = vmatprep.subr.mxu0 0.0
  %1549 = vmatpush1.msra.mxu0 0.0
  %1550 = vmatprep.subr.mxu0 0.0
  %1551 = vmatpush1.msra.mxu0 0.0
  %1552 = vmatprep.subr.mxu0 0.0
  %1553 = vmatpush1.msra.mxu0 0.0
  %1554 = vmatprep.subr.mxu0 0.0
  %1555 = vmatpush1.msra.mxu0 0.0
  %1556 = vmatprep.subr.mxu0 0.0
  %1557 = vmatpush1.msra.mxu0 0.0
  %1558 = vmatprep.subr.mxu0 0.0
  %1559 = vmatpush1.msra.mxu0 0.0
  %1560 = vmatprep.subr.mxu0 0.0
  %1561 = vmatpush1.msra.mxu0 0.0
  %1562 = vmatprep.subr.mxu0 0.0
  %1563 = vmatpush1.msra.mxu0 0.0
  %1564 = vmatprep.subr.mxu0 0.0
  %1565 = vmatpush1.msra.mxu0 0.0
  %1566 = vmatprep.subr.mxu0 0.0
  %1567 = vmatpush1.msra.mxu0 0.0
  %1568 = vmatprep.subr.mxu0 0.0
  %1569 = vmatpush1.msra.mxu0 0.0
  %1570 = vmatprep.subr.mxu0 0.0
  %1571 = vmatpush1.msra.mxu0 0.0
  %1572 = vmatprep.subr.mxu0 0.0
  %1573 = vmatpush1.msra.mxu0 0.0
  %1574 = vmatprep.subr.mxu0 0.0
  %1575 = vmatpush1.msra.mxu0 0.0
  %1576 = vmatprep.subr.mxu0 0.0
  %1577 = vmatpush1.msra.mxu0 0.0
  %1578 = vmatprep.subr.mxu0 0.0
  %1579 = vmatpush1.msra.mxu0 0.0
  %1580 = vmatprep.mubr.f32.mxu0 0.0
  %1581 = vmatmul.mubr.f32.gmra.mrb[0].mxu0 %v1443
  %v1582 = vpop.f32.mrb[0].mxu0
  %v1583 = vadd.f32 0.0, %v1582
  %v1584 = vpop.f32.mrb[0].mxu0
  %v1585 = vadd.f32 0.0, %v1584
  %1586 = vdwg.mxu0
  %v1591 = vrot.slane %v1512, 1
  %v1592 = vrot.slane %v1514, 1
  %v1593 = vrot.slane %v1583, 1
  %v1594 = vrot.slane %v1585, 1
  %v1599 = vadd.f32 %v79, %v1591
  %v1600 = vadd.f32 %v80, %v1592
  %v1601 = vadd.f32 %v81, %v1593
  %v1602 = vadd.f32 %v82, %v1594
  %v1603 = vxor.u32 %v1599, 2147483648
  %v1604 = vmul.f32 %v1603, 1.442695
  %v1605 = vpow.pop %v1604
  %v1606 = vadd.f32 %v1605, 1.0
  %v1607 = vrcp.pop %v1606
  %v1608 = vmul.f32 1.0, %v1607
  %v1609 = vxor.u32 %v1600, 2147483648
  %v1610 = vmul.f32 %v1609, 1.442695
  %v1611 = vpow.pop %v1610
  %v1612 = vadd.f32 %v1611, 1.0
  %v1613 = vrcp.pop %v1612
  %v1614 = vmul.f32 1.0, %v1613
  %v1615 = vtanh.pop %v1601
  %v1616 = vxor.u32 %v1602, 2147483648
  %v1617 = vmul.f32 %v1616, 1.442695
  %v1618 = vpow.pop %v1617
  %v1619 = vadd.f32 %v1618, 1.0
  %v1620 = vrcp.pop %v1619
  %v1621 = vmul.f32 1.0, %v1620
  %v1623 = vrot.slane %v1439, 7
  %v1625 = vmul.f32 %v1614, %v1623
  %v1626 = vmul.f32 %v1608, %v1615
  %v1627 = vadd.f32 %v1625, %v1626
  %v1628 = vtanh.pop %v1627
  %v1629 = vmul.f32 %v1621, %v1628
  %vm1630 = vcmask 1040384
  %v1631 = vsel %vm1630, %v316, %v501
  %vm1632 = vcmask 1041408
  %v1633 = vsel %vm1632, %v1631, %v689
  %vm1634 = vcmask 1042432
  %v1635 = vsel %vm1634, %v1633, %v877
  %vm1636 = vcmask 1043456
  %v1637 = vsel %vm1636, %v1635, %v1065
  %vm1638 = vcmask 1044480
  %v1639 = vsel %vm1638, %v1637, %v1253
  %vm1640 = vcmask 1045504
  %v1641 = vsel %vm1640, %v1639, %v1441
  %vm1642 = vcmask 1046528
  %v1643 = vsel %vm1642, %v1641, %v1629
  %v1644 = vld [vmem:[%s4] sm:$0x1]
  %v1646 = vlaneseq
  %v1647 = vshrl.u32 %v1646, 7
  %v1648 = vsub.s32 0, %v1647
  %v1649 = vrot.slane %v1644, %v1648
  %v1651 = vmul.f32 %v1643, %v1649
  %1652 = vadd.xlane.f32.xlu0 %v1651
  %v1653 = vpop.xlane.xlu0 %1652
  %v1654 = vld [vmem:[#allocation2] sm:$0x1]
  %v1656 = vlaneseq
  %v1657 = vshrl.u32 %v1656, 7
  %v1658 = vsub.s32 0, %v1657
  %v1659 = vrot.slane %v1654, %v1658
  %v1661 = vadd.f32 %v1653, %v1659
  %v1662 = vtanh.pop %v1661
  %vm1663 = vcmask 7168
  %1664 = vst.msk [vmem:[%s6] sm:$0xff] %vm1663, %v1662
  // Predicated region
  $region26: #{lstm_forward_pallas.1} parent=0 // pred_check
    _
  $region27: #{lstm_forward_pallas.1} parent=0 // pred_check_branch
    %1666 = sbr.rel (0) target = $region29
  $region28: #{lstm_forward_pallas.1} parent=0 // pred_region
    _
  $region29: #{lstm_forward_pallas.1} parent=0 // pred_fallthru
    _
  // Predicated region
  $region30: #{lstm_forward_pallas.1} parent=0 // pred_check
    _
  $region31: #{lstm_forward_pallas.1} parent=0 // pred_check_branch
    %1668 = sbr.rel (0) target = $region33
  $region32: #{lstm_forward_pallas.1} parent=0 // pred_region
    _
  $region33: #{lstm_forward_pallas.1} parent=0 // pred_fallthru
    _

</llo_original>
